<compile_context>
chip_gen: v7x
topology: tpu7x:2x2x1
jax: 0.10.0
libtpu: 0.0.40
codegen_flags: <defaults>
</compile_context>

<pallas_src>
import functools

import jax
import jax.numpy as jnp
from jax.experimental import pallas as pl
from jax.experimental.pallas import tpu as pltpu


def _round_up(n, m):
    return ((n + m - 1) // m) * m


def _layernorm(h, eps=1e-5):
    # nn.LayerNorm(normalized_shape=(last_dim,)) freshly constructed in forward:
    # weight=1, bias=0, biased variance, eps=1e-5.  Computed in f32.
    mean = jnp.mean(h, axis=-1, keepdims=True)
    var = jnp.mean((h - mean) * (h - mean), axis=-1, keepdims=True)
    return (h - mean) * jax.lax.rsqrt(var + eps)


def vae_kernel(x_ref, w1_ref, b1_ref, wh_ref, bh_ref, w3_ref, b3_ref,
               w4_ref, b4_ref, eps_ref, out_ref, *, dims):
    # ----- encode -----
    h1 = jnp.dot(x_ref[...], w1_ref[...],
                 preferred_element_type=jnp.float32) + b1_ref[...]
    h1 = _layernorm(jnp.maximum(h1, 0.0))                 # relu + LayerNorm (f32)

    # fused fc21|fc22 head, column-packed into the output slab layout:
    # cols [0, dims) = mu_z, [dims, 2*dims) = logvar_z, rest zero.
    head = jnp.dot(h1, wh_ref[...],
                   preferred_element_type=jnp.float32) + bh_ref[...]

    # ----- reparameterize (f32) -----
    mu_z = head[:, :dims]
    logvar_z = head[:, dims:2 * dims]
    z = mu_z + eps_ref[...] * jnp.exp(0.5 * logvar_z)

    # ----- decode -----
    # fc3 has K = dims (tiny): broadcast multiply-adds on the VPU instead of a
    # wasteful K=2 MXU pass -> one fewer MXU latency hop on the critical path.
    h3 = b3_ref[...]                                       # (1, layer_size) broadcasts up
    for d in range(dims):                                  # dims is static (tiny)
        h3 = h3 + z[:, d:d + 1] * w3_ref[d:d + 1, :]
    h3 = _layernorm(jnp.maximum(h3, 0.0))

    # fc4 is column-packed into cols [2*dims, 2*dims+input_size) (zeros elsewhere),
    # head is zero there, so one add yields the full slab [mu_z | logvar_z | mu_x].
    mux = jnp.dot(h3, w4_ref[...],
                  preferred_element_type=jnp.float32) + b4_ref[...]
    out_ref[...] = head + mux                              # single natural-width store
    # allow_negative_output=True -> no softplus; variant=1 -> scalar logvar_x
    # handled in the wrapper.


def _choose_tile_b(batch):
    """Fat batch tiles (grid-step overhead dominates small tiles), but keep the
    grid >= 2 steps when possible so v7x megacore can split the batch axis."""
    if batch <= 8:
        return 8
    return min(1024, _round_up(pl.cdiv(batch, 2), 8))


@functools.partial(jax.jit, static_argnames=("tile_b",))
def vae_forward(x, kp, logvar_x, eps, *, tile_b=None):
    """Runs the VAE forward pass. Returns (mu_x, logvar_x, mu_z, logvar_z)."""
    batch, input_size = x.shape
    dims = eps.shape[1]
    slab_w = 2 * dims + input_size                         # [mu_z | logvar_z | mu_x]

    if tile_b is None:
        tile_b = _choose_tile_b(batch)
    grid = (pl.cdiv(batch, tile_b),)                       # ragged tail handled by Pallas

    resident = lambda shape: pl.BlockSpec(shape, lambda i: (0, 0))  # weights: DMA once

    out = pl.pallas_call(
        functools.partial(vae_kernel, dims=dims),
        out_shape=jax.ShapeDtypeStruct((batch, slab_w), jnp.float32),
        grid=grid,
        in_specs=[
            pl.BlockSpec((tile_b, input_size), lambda i: (i, 0)),   # x (streamed)
            resident(kp["w1"].shape), resident(kp["b1"].shape),
            resident(kp["w_head"].shape), resident(kp["b_head"].shape),
            resident(kp["w3"].shape), resident(kp["b3"].shape),
            resident(kp["w4"].shape), resident(kp["b4"].shape),
            pl.BlockSpec((tile_b, dims), lambda i: (i, 0)),         # eps (streamed)
        ],
        out_specs=pl.BlockSpec((tile_b, slab_w), lambda i: (i, 0)),
        compiler_params=pltpu.CompilerParams(
            dimension_semantics=("parallel",),     # megacore sharding on v7x
            # ~tile_b*(16+2+20)*4B*2buf ≈ 0.3 MiB/step at tile_b=1024; explicit
            # limit mainly so v5e's 16 MiB default doesn't reject larger tiles.
            vmem_limit_bytes=32 * 1024 * 1024,
        ),
    )(x, kp["w1"], kp["b1"], kp["w_head"], kp["b_head"],
      kp["w3"], kp["b3"], kp["w4"], kp["b4"], eps)

    mu_z = out[:, :dims]
    logvar_z = out[:, dims:2 * dims]
    mu_x = out[:, 2 * dims:]
    return mu_x, logvar_x, mu_z, logvar_z


def init_params(key, input_size, layer_size, dimensions):
    """Deterministic init mimicking nn.Linear (uniform +/- 1/sqrt(fan_in)).
    Weights stored as (in, out) so x @ W matches torch's x @ W.T."""
    def linear(key, fan_in, fan_out):
        kw, kb = jax.random.split(key)
        bound = 1.0 / (fan_in ** 0.5)
        w = jax.random.uniform(kw, (fan_in, fan_out), jnp.float32, -bound, bound)
        b = jax.random.uniform(kb, (1, fan_out), jnp.float32, -bound, bound)
        return w, b

    keys = jax.random.split(key, 5)
    w1, b1 = linear(keys[0], input_size, layer_size)
    w21, b21 = linear(keys[1], layer_size, dimensions)
    w22, b22 = linear(keys[2], layer_size, dimensions)
    w3, b3 = linear(keys[3], dimensions, layer_size)
    w4, b4 = linear(keys[4], layer_size, input_size)
    return {
        "w1": w1, "b1": b1,
        "w21": w21, "b21": b21,
        "w22": w22, "b22": b22,
        "w3": w3, "b3": b3,
        "w4": w4, "b4": b4,
        "logvar": jnp.asarray(0.1, jnp.float32),   # variant=1 scalar Parameter
    }


def pack_params(p):
    """Column-pack fc21/fc22 (cols [0,2*dims)) and fc4 (cols [2*dims, 2*dims+in))
    into the shared natural-width output-slab layout.  All weights stay f32
    (MXU is not the bottleneck; f32 w_head/w3 is free accuracy)."""
    input_size, layer_size = p["w1"].shape
    dims = p["w21"].shape[1]
    slab_w = 2 * dims + input_size

    w_head = jnp.zeros((layer_size, slab_w), jnp.float32)
    w_head = w_head.at[:, :dims].set(p["w21"]).at[:, dims:2 * dims].set(p["w22"])
    b_head = jnp.zeros((1, slab_w), jnp.float32)
    b_head = b_head.at[:, :dims].set(p["b21"]).at[:, dims:2 * dims].set(p["b22"])

    w4p = jnp.zeros((layer_size, slab_w), jnp.float32).at[:, 2 * dims:].set(p["w4"])
    b4p = jnp.zeros((1, slab_w), jnp.float32).at[:, 2 * dims:].set(p["b4"])

    return {
        "w1": p["w1"], "b1": p["b1"],
        "w_head": w_head, "b_head": b_head,
        "w3": p["w3"], "b3": p["b3"],
        "w4": w4p, "b4": b4p,
    }


def vae_forward_ref(x, params, eps):
    """Pure-JAX f32 reference (matches the PyTorch module with the same eps)."""
    h1 = _layernorm(jnp.maximum(x @ params["w1"] + params["b1"], 0.0))
    mu_z = h1 @ params["w21"] + params["b21"]
    logvar_z = h1 @ params["w22"] + params["b22"]
    z = mu_z + eps * jnp.exp(0.5 * logvar_z)
    h3 = _layernorm(jnp.maximum(z @ params["w3"] + params["b3"], 0.0))
    mu_x = h3 @ params["w4"] + params["b4"]
    return mu_x, params["logvar"], mu_z, logvar_z


if __name__ == "__main__":
    batch, input_size, layer_size, dimensions = 256, 16, 32, 2

    key = jax.random.PRNGKey(0)
    k_param, k_x, k_eps = jax.random.split(key, 3)

    params = init_params(k_param, input_size, layer_size, dimensions)
    kparams = pack_params(params)
    x = jax.random.normal(k_x, (batch, input_size), jnp.float32)
    # TODO(synk): torch.randn_like noise is drawn outside the kernel so the
    # pure-JAX reference sees identical eps (in-kernel pltpu PRNG would avoid
    # the eps stream but would not be bit-reproducible against the reference).
    eps = jax.random.normal(k_eps, (batch, dimensions), jnp.float32)

    mu_x, logvar_x, mu_z, logvar_z = jax.block_until_ready(
        vae_forward(x, kparams, params["logvar"], eps))

    # sanity check against the f32 reference
    r_mu_x, r_logvar_x, r_mu_z, r_logvar_z = vae_forward_ref(x, params, eps)
    assert jnp.allclose(mu_x, r_mu_x, atol=5e-2, rtol=5e-2)
    assert jnp.allclose(mu_z, r_mu_z, atol=5e-2, rtol=5e-2)
    assert jnp.allclose(logvar_z, r_logvar_z, atol=5e-2, rtol=5e-2)
    assert jnp.allclose(logvar_x, r_logvar_x)

    print("KERNEL_OK")
</pallas_src>

<mosaic_0001>
module attributes {stable_mosaic.version = 11 : i64} {
  func.func @vae_kernel(%arg0: i32, %arg1: memref<128x16xf32, #tpu.memory_space<vmem>>, %arg2: memref<16x32xf32, #tpu.memory_space<vmem>>, %arg3: memref<1x32xf32, #tpu.memory_space<vmem>>, %arg4: memref<32x20xf32, #tpu.memory_space<vmem>>, %arg5: memref<1x20xf32, #tpu.memory_space<vmem>>, %arg6: memref<2x32xf32, #tpu.memory_space<vmem>>, %arg7: memref<1x32xf32, #tpu.memory_space<vmem>>, %arg8: memref<32x20xf32, #tpu.memory_space<vmem>>, %arg9: memref<1x20xf32, #tpu.memory_space<vmem>>, %arg10: memref<128x2xf32, #tpu.memory_space<vmem>>, %arg11: memref<128x20xf32, #tpu.memory_space<vmem>>) attributes {dimension_semantics = [#tpu.dimension_semantics<parallel>], iteration_bounds = array<i64: 2>, scalar_prefetch = 0 : i64, scratch_operands = 0 : i64, tpu.core_type = #tpu.core_type<tc>, window_params = [{transform_indices = @transform_0, window_bounds = array<i64: 128, 16>}, {pipeline_mode = #tpu.pipeline_mode<synchronous>, transform_indices = @transform_1, window_bounds = array<i64: 16, 32>}, {pipeline_mode = #tpu.pipeline_mode<synchronous>, transform_indices = @transform_2, window_bounds = array<i64: 1, 32>}, {pipeline_mode = #tpu.pipeline_mode<synchronous>, transform_indices = @transform_3, window_bounds = array<i64: 32, 20>}, {pipeline_mode = #tpu.pipeline_mode<synchronous>, transform_indices = @transform_4, window_bounds = array<i64: 1, 20>}, {pipeline_mode = #tpu.pipeline_mode<synchronous>, transform_indices = @transform_5, window_bounds = array<i64: 2, 32>}, {pipeline_mode = #tpu.pipeline_mode<synchronous>, transform_indices = @transform_6, window_bounds = array<i64: 1, 32>}, {pipeline_mode = #tpu.pipeline_mode<synchronous>, transform_indices = @transform_7, window_bounds = array<i64: 32, 20>}, {pipeline_mode = #tpu.pipeline_mode<synchronous>, transform_indices = @transform_8, window_bounds = array<i64: 1, 20>}, {transform_indices = @transform_9, window_bounds = array<i64: 128, 2>}, {transform_indices = @transform_10, window_bounds = array<i64: 128, 20>}]} {
    %c0 = arith.constant 0 : index
    %c0_0 = arith.constant 0 : index
    %0 = vector.load %arg1[%c0, %c0_0] : memref<128x16xf32, #tpu.memory_space<vmem>>, vector<128x16xf32>
    %c0_1 = arith.constant 0 : index
    %c0_2 = arith.constant 0 : index
    %1 = vector.load %arg2[%c0_1, %c0_2] : memref<16x32xf32, #tpu.memory_space<vmem>>, vector<16x32xf32>
    %cst = arith.constant dense<0.000000e+00> : vector<128x32xf32>
    %2 = tpu.matmul %0, %1, %cst {dimension_numbers = #tpu.dot_dimension_numbers<[1], [0], [0], [1], [0, 0, 1, 1], [], []>} : vector<128x16xf32>, vector<16x32xf32>, vector<128x32xf32> -> vector<128x32xf32>
    %c0_3 = arith.constant 0 : index
    %c0_4 = arith.constant 0 : index
    %3 = vector.load %arg3[%c0_3, %c0_4] : memref<1x32xf32, #tpu.memory_space<vmem>>, vector<1x32xf32>
    %4 = vector.broadcast %3 : vector<1x32xf32> to vector<128x32xf32>
    %5 = arith.addf %2, %4 : vector<128x32xf32>
    %cst_5 = arith.constant 0.000000e+00 : f32
    %6 = vector.broadcast %cst_5 : f32 to vector<128x32xf32>
    %7 = arith.maximumf %5, %6 : vector<128x32xf32>
    %cst_6 = arith.constant dense<0.000000e+00> : vector<128xf32>
    %8 = vector.multi_reduction <add>, %7, %cst_6 [1] : vector<128x32xf32> to vector<128xf32>
    %9 = vector.shape_cast %8 : vector<128xf32> to vector<128x1xf32>
    %cst_7 = arith.constant 3.200000e+01 : f32
    %10 = vector.broadcast %cst_7 : f32 to vector<128x1xf32>
    %11 = arith.divf %9, %10 : vector<128x1xf32>
    %12 = vector.broadcast %11 : vector<128x1xf32> to vector<128x32xf32>
    %13 = arith.subf %7, %12 : vector<128x32xf32>
    %14 = vector.broadcast %11 : vector<128x1xf32> to vector<128x32xf32>
    %15 = arith.subf %7, %14 : vector<128x32xf32>
    %16 = arith.mulf %13, %15 : vector<128x32xf32>
    %cst_8 = arith.constant dense<0.000000e+00> : vector<128xf32>
    %17 = vector.multi_reduction <add>, %16, %cst_8 [1] : vector<128x32xf32> to vector<128xf32>
    %18 = vector.shape_cast %17 : vector<128xf32> to vector<128x1xf32>
    %cst_9 = arith.constant 3.200000e+01 : f32
    %19 = vector.broadcast %cst_9 : f32 to vector<128x1xf32>
    %20 = arith.divf %18, %19 : vector<128x1xf32>
    %21 = vector.broadcast %11 : vector<128x1xf32> to vector<128x32xf32>
    %22 = arith.subf %7, %21 : vector<128x32xf32>
    %cst_10 = arith.constant 9.99999974E-6 : f32
    %23 = vector.broadcast %cst_10 : f32 to vector<128x1xf32>
    %24 = arith.addf %20, %23 : vector<128x1xf32>
    %25 = math.rsqrt %24 : vector<128x1xf32>
    %26 = vector.broadcast %25 : vector<128x1xf32> to vector<128x32xf32>
    %27 = arith.mulf %22, %26 : vector<128x32xf32>
    %c0_11 = arith.constant 0 : index
    %c0_12 = arith.constant 0 : index
    %28 = vector.load %arg4[%c0_11, %c0_12] : memref<32x20xf32, #tpu.memory_space<vmem>>, vector<32x20xf32>
    %cst_13 = arith.constant dense<0.000000e+00> : vector<128x20xf32>
    %29 = tpu.matmul %27, %28, %cst_13 {dimension_numbers = #tpu.dot_dimension_numbers<[1], [0], [0], [1], [0, 0, 1, 1], [], []>} : vector<128x32xf32>, vector<32x20xf32>, vector<128x20xf32> -> vector<128x20xf32>
    %c0_14 = arith.constant 0 : index
    %c0_15 = arith.constant 0 : index
    %30 = vector.load %arg5[%c0_14, %c0_15] : memref<1x20xf32, #tpu.memory_space<vmem>>, vector<1x20xf32>
    %31 = vector.broadcast %30 : vector<1x20xf32> to vector<128x20xf32>
    %32 = arith.addf %29, %31 : vector<128x20xf32>
    %33 = vector.extract_strided_slice %32 {offsets = [0, 0], sizes = [128, 2], strides = [1, 1]} : vector<128x20xf32> to vector<128x2xf32>
    %34 = vector.extract_strided_slice %32 {offsets = [0, 2], sizes = [128, 2], strides = [1, 1]} : vector<128x20xf32> to vector<128x2xf32>
    %c0_16 = arith.constant 0 : index
    %c0_17 = arith.constant 0 : index
    %35 = vector.load %arg10[%c0_16, %c0_17] : memref<128x2xf32, #tpu.memory_space<vmem>>, vector<128x2xf32>
    %cst_18 = arith.constant 5.000000e-01 : f32
    %36 = vector.broadcast %cst_18 : f32 to vector<128x2xf32>
    %37 = arith.mulf %36, %34 : vector<128x2xf32>
    %38 = math.exp %37 : vector<128x2xf32>
    %39 = arith.mulf %35, %38 : vector<128x2xf32>
    %40 = arith.addf %33, %39 : vector<128x2xf32>
    %c0_19 = arith.constant 0 : index
    %c0_20 = arith.constant 0 : index
    %41 = vector.load %arg7[%c0_19, %c0_20] : memref<1x32xf32, #tpu.memory_space<vmem>>, vector<1x32xf32>
    %42 = vector.extract_strided_slice %40 {offsets = [0, 0], sizes = [128, 1], strides = [1, 1]} : vector<128x2xf32> to vector<128x1xf32>
    %c0_21 = arith.constant 0 : index
    %c0_22 = arith.constant 0 : index
    %43 = vector.load %arg6[%c0_21, %c0_22] : memref<2x32xf32, #tpu.memory_space<vmem>>, vector<1x32xf32>
    %44 = vector.broadcast %42 : vector<128x1xf32> to vector<128x32xf32>
    %45 = vector.broadcast %43 : vector<1x32xf32> to vector<128x32xf32>
    %46 = arith.mulf %44, %45 : vector<128x32xf32>
    %47 = vector.broadcast %41 : vector<1x32xf32> to vector<128x32xf32>
    %48 = arith.addf %47, %46 : vector<128x32xf32>
    %49 = vector.extract_strided_slice %40 {offsets = [0, 1], sizes = [128, 1], strides = [1, 1]} : vector<128x2xf32> to vector<128x1xf32>
    %c1 = arith.constant 1 : index
    %c0_23 = arith.constant 0 : index
    %50 = vector.load %arg6[%c1, %c0_23] : memref<2x32xf32, #tpu.memory_space<vmem>>, vector<1x32xf32>
    %51 = vector.broadcast %49 : vector<128x1xf32> to vector<128x32xf32>
    %52 = vector.broadcast %50 : vector<1x32xf32> to vector<128x32xf32>
    %53 = arith.mulf %51, %52 : vector<128x32xf32>
    %54 = arith.addf %48, %53 : vector<128x32xf32>
    %cst_24 = arith.constant 0.000000e+00 : f32
    %55 = vector.broadcast %cst_24 : f32 to vector<128x32xf32>
    %56 = arith.maximumf %54, %55 : vector<128x32xf32>
    %cst_25 = arith.constant dense<0.000000e+00> : vector<128xf32>
    %57 = vector.multi_reduction <add>, %56, %cst_25 [1] : vector<128x32xf32> to vector<128xf32>
    %58 = vector.shape_cast %57 : vector<128xf32> to vector<128x1xf32>
    %cst_26 = arith.constant 3.200000e+01 : f32
    %59 = vector.broadcast %cst_26 : f32 to vector<128x1xf32>
    %60 = arith.divf %58, %59 : vector<128x1xf32>
    %61 = vector.broadcast %60 : vector<128x1xf32> to vector<128x32xf32>
    %62 = arith.subf %56, %61 : vector<128x32xf32>
    %63 = vector.broadcast %60 : vector<128x1xf32> to vector<128x32xf32>
    %64 = arith.subf %56, %63 : vector<128x32xf32>
    %65 = arith.mulf %62, %64 : vector<128x32xf32>
    %cst_27 = arith.constant dense<0.000000e+00> : vector<128xf32>
    %66 = vector.multi_reduction <add>, %65, %cst_27 [1] : vector<128x32xf32> to vector<128xf32>
    %67 = vector.shape_cast %66 : vector<128xf32> to vector<128x1xf32>
    %cst_28 = arith.constant 3.200000e+01 : f32
    %68 = vector.broadcast %cst_28 : f32 to vector<128x1xf32>
    %69 = arith.divf %67, %68 : vector<128x1xf32>
    %70 = vector.broadcast %60 : vector<128x1xf32> to vector<128x32xf32>
    %71 = arith.subf %56, %70 : vector<128x32xf32>
    %cst_29 = arith.constant 9.99999974E-6 : f32
    %72 = vector.broadcast %cst_29 : f32 to vector<128x1xf32>
    %73 = arith.addf %69, %72 : vector<128x1xf32>
    %74 = math.rsqrt %73 : vector<128x1xf32>
    %75 = vector.broadcast %74 : vector<128x1xf32> to vector<128x32xf32>
    %76 = arith.mulf %71, %75 : vector<128x32xf32>
    %c0_30 = arith.constant 0 : index
    %c0_31 = arith.constant 0 : index
    %77 = vector.load %arg8[%c0_30, %c0_31] : memref<32x20xf32, #tpu.memory_space<vmem>>, vector<32x20xf32>
    %cst_32 = arith.constant dense<0.000000e+00> : vector<128x20xf32>
    %78 = tpu.matmul %76, %77, %cst_32 {dimension_numbers = #tpu.dot_dimension_numbers<[1], [0], [0], [1], [0, 0, 1, 1], [], []>} : vector<128x32xf32>, vector<32x20xf32>, vector<128x20xf32> -> vector<128x20xf32>
    %c0_33 = arith.constant 0 : index
    %c0_34 = arith.constant 0 : index
    %79 = vector.load %arg9[%c0_33, %c0_34] : memref<1x20xf32, #tpu.memory_space<vmem>>, vector<1x20xf32>
    %80 = vector.broadcast %79 : vector<1x20xf32> to vector<128x20xf32>
    %81 = arith.addf %78, %80 : vector<128x20xf32>
    %82 = arith.addf %32, %81 : vector<128x20xf32>
    %c0_35 = arith.constant 0 : index
    %c0_36 = arith.constant 0 : index
    %83 = vector.load %arg11[%c0_35, %c0_36] : memref<128x20xf32, #tpu.memory_space<vmem>>, vector<128x20xf32>
    tpu.vector_store %arg11[%c0_35, %c0_36], %82 {strides = array<i32>} : memref<128x20xf32, #tpu.memory_space<vmem>>, vector<128x20xf32>,
    return
  }
  func.func @transform_0(%arg0: i32) -> (i32, i32) {
    %c0_i32 = arith.constant 0 : i32
    %c0_i32_0 = arith.constant 0 : i32
    return %arg0, %c0_i32 : i32, i32
  }
  func.func @transform_1(%arg0: i32) -> (i32, i32) {
    %c0_i32 = arith.constant 0 : i32
    %c0_i32_0 = arith.constant 0 : i32
    %c0_i32_1 = arith.constant 0 : i32
    return %c0_i32, %c0_i32_0 : i32, i32
  }
  func.func @transform_2(%arg0: i32) -> (i32, i32) {
    %c0_i32 = arith.constant 0 : i32
    %c0_i32_0 = arith.constant 0 : i32
    %c0_i32_1 = arith.constant 0 : i32
    return %c0_i32, %c0_i32_0 : i32, i32
  }
  func.func @transform_3(%arg0: i32) -> (i32, i32) {
    %c0_i32 = arith.constant 0 : i32
    %c0_i32_0 = arith.constant 0 : i32
    %c0_i32_1 = arith.constant 0 : i32
    return %c0_i32, %c0_i32_0 : i32, i32
  }
  func.func @transform_4(%arg0: i32) -> (i32, i32) {
    %c0_i32 = arith.constant 0 : i32
    %c0_i32_0 = arith.constant 0 : i32
    %c0_i32_1 = arith.constant 0 : i32
    return %c0_i32, %c0_i32_0 : i32, i32
  }
  func.func @transform_5(%arg0: i32) -> (i32, i32) {
    %c0_i32 = arith.constant 0 : i32
    %c0_i32_0 = arith.constant 0 : i32
    %c0_i32_1 = arith.constant 0 : i32
    return %c0_i32, %c0_i32_0 : i32, i32
  }
  func.func @transform_6(%arg0: i32) -> (i32, i32) {
    %c0_i32 = arith.constant 0 : i32
    %c0_i32_0 = arith.constant 0 : i32
    %c0_i32_1 = arith.constant 0 : i32
    return %c0_i32, %c0_i32_0 : i32, i32
  }
  func.func @transform_7(%arg0: i32) -> (i32, i32) {
    %c0_i32 = arith.constant 0 : i32
    %c0_i32_0 = arith.constant 0 : i32
    %c0_i32_1 = arith.constant 0 : i32
    return %c0_i32, %c0_i32_0 : i32, i32
  }
  func.func @transform_8(%arg0: i32) -> (i32, i32) {
    %c0_i32 = arith.constant 0 : i32
    %c0_i32_0 = arith.constant 0 : i32
    %c0_i32_1 = arith.constant 0 : i32
    return %c0_i32, %c0_i32_0 : i32, i32
  }
  func.func @transform_9(%arg0: i32) -> (i32, i32) {
    %c0_i32 = arith.constant 0 : i32
    %c0_i32_0 = arith.constant 0 : i32
    return %arg0, %c0_i32 : i32, i32
  }
  func.func @transform_10(%arg0: i32) -> (i32, i32) {
    %c0_i32 = arith.constant 0 : i32
    %c0_i32_0 = arith.constant 0 : i32
    return %arg0, %c0_i32 : i32, i32
  }
}

</mosaic_0001>

<llo_original>
// kernel: vae_forward.1
$region0: #{vae_forward.1}
  #allocation0 [shape = 'u32[]', space=smem, size = 0x4, offset = 0x4, fixed_abs, tag = 'smem constant byte address 0x4 - core index']
  #allocation1 [shape = 'u32[144,128]{1,0:T(1,128)}', space=vmem, size = 0x12000, scoped, tag = 'internal scratch']
  %s0 = inlined_call_operand.vmem [shape: f32[256,16], index: 0, kind: input, shape index: {}]
  %s1 = inlined_call_operand.vmem [shape: f32[16,32], index: 1, kind: input, shape index: {}]
  %s2 = inlined_call_operand.vmem [shape: f32[1,32], index: 2, kind: input, shape index: {}]
  %s3 = inlined_call_operand.vmem [shape: f32[32,20], index: 3, kind: input, shape index: {}]
  %s4 = inlined_call_operand.vmem [shape: f32[1,20], index: 4, kind: input, shape index: {}]
  %s5 = inlined_call_operand.vmem [shape: f32[2,32], index: 5, kind: input, shape index: {}]
  %s6 = inlined_call_operand.vmem [shape: f32[1,32], index: 6, kind: input, shape index: {}]
  %s7 = inlined_call_operand.vmem [shape: f32[32,20], index: 7, kind: input, shape index: {}]
  %s8 = inlined_call_operand.vmem [shape: f32[1,20], index: 8, kind: input, shape index: {}]
  %s9 = inlined_call_operand.vmem [shape: f32[256,2], index: 9, kind: input, shape index: {}]
  %s10 = inlined_call_operand.vmem [shape: f32[256,20], index: 10, kind: output, shape index: {}]
  %s11 = sld [smem:[#allocation0]]
  $region73: #{vae_forward.1} parent=0
    _
  %s13 = ssub.s32 1, %s11
  %s14 = scalar_select 0, %s13, %s11
  loop: start=0, step=1, limit=4
  $region2: #{vae_forward.1} parent=0 // loop_pre_header
    _
  $region3: #{vae_forward.1} parent=0 // loop_header
    %s16 = sphi 0, %s20
    %p17 = scmp.ge.s32.totalorder %s16, 4
    %s26 = sphi 0, %s28
    %s29 = sphi 0, %s26
    %s30 = sphi 0, %s29
    %s46 = sphi 0, %s30
    %s50 = sphi 0, %s50
    %s52 = sphi 0, %s50
    %s53 = sphi 0, %s52
    %s67 = sphi 0, %s53
    %s71 = sphi 0, %s71
    %s73 = sphi 0, %s71
    %s74 = sphi 0, %s73
    %s88 = sphi 0, %s74
    %s92 = sphi 0, %s92
    %s94 = sphi 0, %s92
    %s95 = sphi 0, %s94
    %s109 = sphi 0, %s95
    %s113 = sphi 0, %s113
    %s115 = sphi 0, %s113
    %s116 = sphi 0, %s115
    %s130 = sphi 0, %s116
    %s134 = sphi 0, %s134
    %s136 = sphi 0, %s134
    %s137 = sphi 0, %s136
    %s151 = sphi 0, %s137
    %s155 = sphi 0, %s155
    %s157 = sphi 0, %s155
    %s158 = sphi 0, %s157
    %s172 = sphi 0, %s158
    %s176 = sphi 0, %s176
    %s178 = sphi 0, %s176
    %s179 = sphi 0, %s178
    %s193 = sphi 0, %s179
    %s197 = sphi 0, %s197
    %s199 = sphi 0, %s197
    %s200 = sphi 0, %s199
    %s214 = sphi 0, %s200
    %s220 = sphi 0, %s222
    %s223 = sphi 0, %s220
    %s224 = sphi 0, %s223
    %s240 = sphi 0, %s224
    %s246 = sphi 0, %s248
    %s249 = sphi 0, %s246
    %s250 = sphi 0, %s249
    %s266 = sphi 0, %s250
  $region4: #{vae_forward.1} parent=0 // loop_header_branch
    %19 = sbr.rel (%p17) target = $region8
  $region5: #{vae_forward.1} parent=0 // loop_body
    %s21 = ssub.s32 %s16, 1
    %s22 = ssub.s32 %s16, 2
    %s23 = sadd.s32 %s16, 1
    %s24 = ssub.s32 %s16, %s23
    %p25 = scmp.eq.s32.totalorder %s24, 0
    %s27 = sadd.s32 %s26, 1
    %s28 = scalar_select %p25, %s26, %s27
    %p31 = pneg %p25
    %p32 = scmp.eq.s32.totalorder %s16, 1
    %p33 = por %p31, %p32
    %p34 = scmp.ne.s32.totalorder %s26, %s29
    %p35 = scmp.eq.s32.totalorder %s16, 0
    %p36 = por %p34, %p35
    %p37 = scmp.ne.s32.totalorder %s26, %s29
    %p38 = scmp.eq.s32.totalorder %s21, 1
    %p39 = por %p37, %p38
    %p40 = scmp.ne.s32.totalorder %s29, %s30
    %p41 = scmp.eq.s32.totalorder %s21, 0
    %p42 = por %p40, %p41
    %p43 = scmp.ne.s32.totalorder %s29, %s30
    %p44 = scmp.eq.s32.totalorder %s22, 1
    %p45 = por %p43, %p44
    %p47 = scmp.ne.s32.totalorder %s30, %s46
    %p48 = scmp.eq.s32.totalorder %s22, 0
    %p49 = por %p47, %p48
    %s51 = sadd.s32 %s50, 1
    %p54 = scmp.eq.s32.totalorder %s16, 1
    %p55 = scmp.ne.s32.totalorder %s50, %s52
    %p56 = scmp.eq.s32.totalorder %s16, 0
    %p57 = por %p55, %p56
    %p58 = scmp.ne.s32.totalorder %s50, %s52
    %p59 = scmp.eq.s32.totalorder %s21, 1
    %p60 = por %p58, %p59
    %p61 = scmp.ne.s32.totalorder %s52, %s53
    %p62 = scmp.eq.s32.totalorder %s21, 0
    %p63 = por %p61, %p62
    %p64 = scmp.ne.s32.totalorder %s52, %s53
    %p65 = scmp.eq.s32.totalorder %s22, 1
    %p66 = por %p64, %p65
    %p68 = scmp.ne.s32.totalorder %s53, %s67
    %p69 = scmp.eq.s32.totalorder %s22, 0
    %p70 = por %p68, %p69
    %s72 = sadd.s32 %s71, 1
    %p75 = scmp.eq.s32.totalorder %s16, 1
    %p76 = scmp.ne.s32.totalorder %s71, %s73
    %p77 = scmp.eq.s32.totalorder %s16, 0
    %p78 = por %p76, %p77
    %p79 = scmp.ne.s32.totalorder %s71, %s73
    %p80 = scmp.eq.s32.totalorder %s21, 1
    %p81 = por %p79, %p80
    %p82 = scmp.ne.s32.totalorder %s73, %s74
    %p83 = scmp.eq.s32.totalorder %s21, 0
    %p84 = por %p82, %p83
    %p85 = scmp.ne.s32.totalorder %s73, %s74
    %p86 = scmp.eq.s32.totalorder %s22, 1
    %p87 = por %p85, %p86
    %p89 = scmp.ne.s32.totalorder %s74, %s88
    %p90 = scmp.eq.s32.totalorder %s22, 0
    %p91 = por %p89, %p90
    %s93 = sadd.s32 %s92, 1
    %p96 = scmp.eq.s32.totalorder %s16, 1
    %p97 = scmp.ne.s32.totalorder %s92, %s94
    %p98 = scmp.eq.s32.totalorder %s16, 0
    %p99 = por %p97, %p98
    %p100 = scmp.ne.s32.totalorder %s92, %s94
    %p101 = scmp.eq.s32.totalorder %s21, 1
    %p102 = por %p100, %p101
    %p103 = scmp.ne.s32.totalorder %s94, %s95
    %p104 = scmp.eq.s32.totalorder %s21, 0
    %p105 = por %p103, %p104
    %p106 = scmp.ne.s32.totalorder %s94, %s95
    %p107 = scmp.eq.s32.totalorder %s22, 1
    %p108 = por %p106, %p107
    %p110 = scmp.ne.s32.totalorder %s95, %s109
    %p111 = scmp.eq.s32.totalorder %s22, 0
    %p112 = por %p110, %p111
    %s114 = sadd.s32 %s113, 1
    %p117 = scmp.eq.s32.totalorder %s16, 1
    %p118 = scmp.ne.s32.totalorder %s113, %s115
    %p119 = scmp.eq.s32.totalorder %s16, 0
    %p120 = por %p118, %p119
    %p121 = scmp.ne.s32.totalorder %s113, %s115
    %p122 = scmp.eq.s32.totalorder %s21, 1
    %p123 = por %p121, %p122
    %p124 = scmp.ne.s32.totalorder %s115, %s116
    %p125 = scmp.eq.s32.totalorder %s21, 0
    %p126 = por %p124, %p125
    %p127 = scmp.ne.s32.totalorder %s115, %s116
    %p128 = scmp.eq.s32.totalorder %s22, 1
    %p129 = por %p127, %p128
    %p131 = scmp.ne.s32.totalorder %s116, %s130
    %p132 = scmp.eq.s32.totalorder %s22, 0
    %p133 = por %p131, %p132
    %s135 = sadd.s32 %s134, 1
    %p138 = scmp.eq.s32.totalorder %s16, 1
    %p139 = scmp.ne.s32.totalorder %s134, %s136
    %p140 = scmp.eq.s32.totalorder %s16, 0
    %p141 = por %p139, %p140
    %p142 = scmp.ne.s32.totalorder %s134, %s136
    %p143 = scmp.eq.s32.totalorder %s21, 1
    %p144 = por %p142, %p143
    %p145 = scmp.ne.s32.totalorder %s136, %s137
    %p146 = scmp.eq.s32.totalorder %s21, 0
    %p147 = por %p145, %p146
    %p148 = scmp.ne.s32.totalorder %s136, %s137
    %p149 = scmp.eq.s32.totalorder %s22, 1
    %p150 = por %p148, %p149
    %p152 = scmp.ne.s32.totalorder %s137, %s151
    %p153 = scmp.eq.s32.totalorder %s22, 0
    %p154 = por %p152, %p153
    %s156 = sadd.s32 %s155, 1
    %p159 = scmp.eq.s32.totalorder %s16, 1
    %p160 = scmp.ne.s32.totalorder %s155, %s157
    %p161 = scmp.eq.s32.totalorder %s16, 0
    %p162 = por %p160, %p161
    %p163 = scmp.ne.s32.totalorder %s155, %s157
    %p164 = scmp.eq.s32.totalorder %s21, 1
    %p165 = por %p163, %p164
    %p166 = scmp.ne.s32.totalorder %s157, %s158
    %p167 = scmp.eq.s32.totalorder %s21, 0
    %p168 = por %p166, %p167
    %p169 = scmp.ne.s32.totalorder %s157, %s158
    %p170 = scmp.eq.s32.totalorder %s22, 1
    %p171 = por %p169, %p170
    %p173 = scmp.ne.s32.totalorder %s158, %s172
    %p174 = scmp.eq.s32.totalorder %s22, 0
    %p175 = por %p173, %p174
    %s177 = sadd.s32 %s176, 1
    %p180 = scmp.eq.s32.totalorder %s16, 1
    %p181 = scmp.ne.s32.totalorder %s176, %s178
    %p182 = scmp.eq.s32.totalorder %s16, 0
    %p183 = por %p181, %p182
    %p184 = scmp.ne.s32.totalorder %s176, %s178
    %p185 = scmp.eq.s32.totalorder %s21, 1
    %p186 = por %p184, %p185
    %p187 = scmp.ne.s32.totalorder %s178, %s179
    %p188 = scmp.eq.s32.totalorder %s21, 0
    %p189 = por %p187, %p188
    %p190 = scmp.ne.s32.totalorder %s178, %s179
    %p191 = scmp.eq.s32.totalorder %s22, 1
    %p192 = por %p190, %p191
    %p194 = scmp.ne.s32.totalorder %s179, %s193
    %p195 = scmp.eq.s32.totalorder %s22, 0
    %p196 = por %p194, %p195
    %s198 = sadd.s32 %s197, 1
    %p201 = scmp.eq.s32.totalorder %s16, 1
    %p202 = scmp.ne.s32.totalorder %s197, %s199
    %p203 = scmp.eq.s32.totalorder %s16, 0
    %p204 = por %p202, %p203
    %p205 = scmp.ne.s32.totalorder %s197, %s199
    %p206 = scmp.eq.s32.totalorder %s21, 1
    %p207 = por %p205, %p206
    %p208 = scmp.ne.s32.totalorder %s199, %s200
    %p209 = scmp.eq.s32.totalorder %s21, 0
    %p210 = por %p208, %p209
    %p211 = scmp.ne.s32.totalorder %s199, %s200
    %p212 = scmp.eq.s32.totalorder %s22, 1
    %p213 = por %p211, %p212
    %p215 = scmp.ne.s32.totalorder %s200, %s214
    %p216 = scmp.eq.s32.totalorder %s22, 0
    %p217 = por %p215, %p216
    %s218 = ssub.s32 %s16, %s23
    %p219 = scmp.eq.s32.totalorder %s218, 0
    %s221 = sadd.s32 %s220, 1
    %s222 = scalar_select %p219, %s220, %s221
    %p225 = pneg %p219
    %p226 = scmp.eq.s32.totalorder %s16, 1
    %p227 = por %p225, %p226
    %p228 = scmp.ne.s32.totalorder %s220, %s223
    %p229 = scmp.eq.s32.totalorder %s16, 0
    %p230 = por %p228, %p229
    %p231 = scmp.ne.s32.totalorder %s220, %s223
    %p232 = scmp.eq.s32.totalorder %s21, 1
    %p233 = por %p231, %p232
    %p234 = scmp.ne.s32.totalorder %s223, %s224
    %p235 = scmp.eq.s32.totalorder %s21, 0
    %p236 = por %p234, %p235
    %p237 = scmp.ne.s32.totalorder %s223, %s224
    %p238 = scmp.eq.s32.totalorder %s22, 1
    %p239 = por %p237, %p238
    %p241 = scmp.ne.s32.totalorder %s224, %s240
    %p242 = scmp.eq.s32.totalorder %s22, 0
    %p243 = por %p241, %p242
    %s244 = ssub.s32 %s16, %s23
    %p245 = scmp.eq.s32.totalorder %s244, 0
    %s247 = sadd.s32 %s246, 1
    %s248 = scalar_select %p245, %s246, %s247
    %p251 = pneg %p245
    %p252 = scmp.eq.s32.totalorder %s16, 1
    %p253 = por %p251, %p252
    %p254 = scmp.ne.s32.totalorder %s246, %s249
    %p255 = scmp.eq.s32.totalorder %s16, 0
    %p256 = por %p254, %p255
    %p257 = scmp.ne.s32.totalorder %s246, %s249
    %p258 = scmp.eq.s32.totalorder %s21, 1
    %p259 = por %p257, %p258
    %p260 = scmp.ne.s32.totalorder %s249, %s250
    %p261 = scmp.eq.s32.totalorder %s21, 0
    %p262 = por %p260, %p261
    %p263 = scmp.ne.s32.totalorder %s249, %s250
    %p264 = scmp.eq.s32.totalorder %s22, 1
    %p265 = por %p263, %p264
    %p267 = scmp.ne.s32.totalorder %s250, %s266
    %p268 = scmp.eq.s32.totalorder %s22, 0
    %p269 = por %p267, %p268
    %p270 = scmp.le.s32.totalorder 1, %s16
    %p271 = scmp.lt.s32.totalorder %s16, 3
    %p272 = pnand %p270, %p271
    %p273 = pneg %p272
    // Predicated region
    $region9: #{vae_forward.1} parent=5 // pred_check
      _
    $region10: #{vae_forward.1} parent=5 // pred_check_branch
      %275 = sbr.rel (%p272) target = $region12
    $region11: #{vae_forward.1} parent=5 // pred_region
      %s276 = ssub.s32 %s16, 1
      // Predicated region
      $region13: #{vae_forward.1} parent=11 // pred_check
        %p277 = pneg %p63
      $region14: #{vae_forward.1} parent=11 // pred_check_branch
        %279 = sbr.rel (%p277) target = $region16
      $region15: #{vae_forward.1} parent=11 // pred_region
        _
      $region16: #{vae_forward.1} parent=11 // pred_fallthru
        _
      // Predicated region
      $region17: #{vae_forward.1} parent=11 // pred_check
        %p280 = pneg %p84
      $region18: #{vae_forward.1} parent=11 // pred_check_branch
        %282 = sbr.rel (%p280) target = $region20
      $region19: #{vae_forward.1} parent=11 // pred_region
        _
      $region20: #{vae_forward.1} parent=11 // pred_fallthru
        _
      // Predicated region
      $region21: #{vae_forward.1} parent=11 // pred_check
        %p283 = pneg %p105
      $region22: #{vae_forward.1} parent=11 // pred_check_branch
        %285 = sbr.rel (%p283) target = $region24
      $region23: #{vae_forward.1} parent=11 // pred_region
        _
      $region24: #{vae_forward.1} parent=11 // pred_fallthru
        _
      // Predicated region
      $region25: #{vae_forward.1} parent=11 // pred_check
        %p286 = pneg %p126
      $region26: #{vae_forward.1} parent=11 // pred_check_branch
        %288 = sbr.rel (%p286) target = $region28
      $region27: #{vae_forward.1} parent=11 // pred_region
        _
      $region28: #{vae_forward.1} parent=11 // pred_fallthru
        _
      // Predicated region
      $region29: #{vae_forward.1} parent=11 // pred_check
        %p289 = pneg %p147
      $region30: #{vae_forward.1} parent=11 // pred_check_branch
        %291 = sbr.rel (%p289) target = $region32
      $region31: #{vae_forward.1} parent=11 // pred_region
        _
      $region32: #{vae_forward.1} parent=11 // pred_fallthru
        _
      // Predicated region
      $region33: #{vae_forward.1} parent=11 // pred_check
        %p292 = pneg %p168
      $region34: #{vae_forward.1} parent=11 // pred_check_branch
        %294 = sbr.rel (%p292) target = $region36
      $region35: #{vae_forward.1} parent=11 // pred_region
        _
      $region36: #{vae_forward.1} parent=11 // pred_fallthru
        _
      // Predicated region
      $region37: #{vae_forward.1} parent=11 // pred_check
        %p295 = pneg %p189
      $region38: #{vae_forward.1} parent=11 // pred_check_branch
        %297 = sbr.rel (%p295) target = $region40
      $region39: #{vae_forward.1} parent=11 // pred_region
        _
      $region40: #{vae_forward.1} parent=11 // pred_fallthru
        _
      // Predicated region
      $region41: #{vae_forward.1} parent=11 // pred_check
        %p298 = pneg %p210
      $region42: #{vae_forward.1} parent=11 // pred_check_branch
        %300 = sbr.rel (%p298) target = $region44
      $region43: #{vae_forward.1} parent=11 // pred_region
        _
      $region44: #{vae_forward.1} parent=11 // pred_fallthru
        _
    $region12: #{vae_forward.1} parent=5 // pred_fallthru
      _
    %p301 = scmp.lt.s32.totalorder %s16, 2
    // Predicated region
    $region45: #{vae_forward.1} parent=5 // pred_check
      %p302 = pneg %p301
    $region46: #{vae_forward.1} parent=5 // pred_check_branch
      %304 = sbr.rel (%p302) target = $region48
    $region47: #{vae_forward.1} parent=5 // pred_region
      // Predicated region
      $region49: #{vae_forward.1} parent=47 // pred_check
        %p305 = pneg %p36
      $region50: #{vae_forward.1} parent=47 // pred_check_branch
        %307 = sbr.rel (%p305) target = $region52
      $region51: #{vae_forward.1} parent=47 // pred_region
        %s308 = smul.u32 16, %s16
        %p309 = scmp.lt.s32.totalorder %s308, 31
        %s310 = scalar_select %p309, %s308, 31
        %s311 = smul.addr %s310, 8
        %s312 = scalar_lea.vmem %s0, %s311
        %s313 = smul.u32 16, %s16
      $region52: #{vae_forward.1} parent=47 // pred_fallthru
        _
      // Predicated region
      $region53: #{vae_forward.1} parent=47 // pred_check
        %p314 = pneg %p230
      $region54: #{vae_forward.1} parent=47 // pred_check_branch
        %316 = sbr.rel (%p314) target = $region56
      $region55: #{vae_forward.1} parent=47 // pred_region
        %s317 = smul.u32 16, %s16
        %p318 = scmp.lt.s32.totalorder %s317, 31
        %s319 = scalar_select %p318, %s317, 31
        %s320 = smul.addr %s319, 8
        %s321 = scalar_lea.vmem %s9, %s320
        %s322 = smul.u32 16, %s16
      $region56: #{vae_forward.1} parent=47 // pred_fallthru
        _
    $region48: #{vae_forward.1} parent=5 // pred_fallthru
      _
    %p323 = scmp.le.s32.totalorder 1, %s16
    %p324 = scmp.lt.s32.totalorder %s16, 3
    %p325 = pnand %p323, %p324
    %p326 = pneg %p325
    // Predicated region
    $region57: #{vae_forward.1} parent=5 // pred_check
      _
    $region58: #{vae_forward.1} parent=5 // pred_check_branch
      %328 = sbr.rel (%p325) target = $region60
    $region59: #{vae_forward.1} parent=5 // pred_region
      %s329 = ssub.s32 %s16, 1
      %s330 = smul.u32 16, %s21
      %p331 = scmp.lt.s32.totalorder %s330, 31
      %s332 = scalar_select %p331, %s330, 31
      %s333 = smul.addr %s332, 8
      %s334 = scalar_lea.vmem %s0, %s333
      %p335 = pneg %p42
      %p336 = pneg %p39
      %p337 = pneg %p63
      %p338 = pneg %p60
      %p339 = pneg %p84
      %p340 = pneg %p81
      %p341 = pneg %p105
      %p342 = pneg %p102
      %p343 = pneg %p126
      %p344 = pneg %p123
      %p345 = pneg %p147
      %p346 = pneg %p144
      %p347 = pneg %p168
      %p348 = pneg %p165
      %p349 = pneg %p189
      %p350 = pneg %p186
      %p351 = pneg %p210
      %p352 = pneg %p207
      %s353 = smul.u32 16, %s21
      %p354 = scmp.lt.s32.totalorder %s353, 31
      %s355 = scalar_select %p354, %s353, 31
      %s356 = smul.addr %s355, 8
      %s357 = scalar_lea.vmem %s9, %s356
      %p358 = pneg %p236
      %p359 = pneg %p233
      %p360 = pneg %p262
      %p361 = pneg %p259
      %s362 = smul.u32 16, %s21
      %p363 = scmp.lt.s32.totalorder %s362, 31
      %s364 = scalar_select %p363, %s362, 31
      %s365 = smul.addr %s364, 8
      %s366 = scalar_lea.vmem %s10, %s365
      %s367 = smul.u32 16, %s21
      %p368 = scmp.lt.s32.totalorder %s367, 31
      %s369 = scalar_select %p368, %s367, 31
      %s370 = smul.addr %s369, 8
      %s371 = scalar_lea.vmem %s0, %s370
      %s372 = smul.u32 16, %s21
      %s373 = smul.u32 16, %s21
      %p374 = scmp.lt.s32.totalorder %s373, 31
      %s375 = scalar_select %p374, %s373, 31
      %s376 = smul.addr %s375, 8
      %s377 = scalar_lea.vmem %s9, %s376
      %s378 = smul.u32 16, %s21
      %s379 = smul.u32 16, %s21
      %p380 = scmp.lt.s32.totalorder %s379, 31
      %s381 = scalar_select %p380, %s379, 31
      %s382 = smul.addr %s381, 8
      %s383 = scalar_lea.vmem %s10, %s382
      %s384 = smul.u32 16, %s21
      %v385 = vld [vmem:[%s371] sm:$0xff]
      %v386 = vld [vmem:[%s371 + $0x8] sm:$0xff]
      %v387 = vld [vmem:[%s371 + $0x10] sm:$0xff]
      %v388 = vld [vmem:[%s371 + $0x18] sm:$0xff]
      %v389 = vld [vmem:[%s371 + $0x20] sm:$0xff]
      %v390 = vld [vmem:[%s371 + $0x28] sm:$0xff]
      %v391 = vld [vmem:[%s371 + $0x30] sm:$0xff]
      %v392 = vld [vmem:[%s371 + $0x38] sm:$0xff]
      %v393 = vld [vmem:[%s371 + $0x40] sm:$0xff]
      %v394 = vld [vmem:[%s371 + $0x48] sm:$0xff]
      %v395 = vld [vmem:[%s371 + $0x50] sm:$0xff]
      %v396 = vld [vmem:[%s371 + $0x58] sm:$0xff]
      %v397 = vld [vmem:[%s371 + $0x60] sm:$0xff]
      %v398 = vld [vmem:[%s371 + $0x68] sm:$0xff]
      %v399 = vld [vmem:[%s371 + $0x70] sm:$0xff]
      %v400 = vld [vmem:[%s371 + $0x78] sm:$0xff]
      %v401 = vld [vmem:[%s1] sm:$0xff]
      %v402 = vld [vmem:[%s1 + $0x8] sm:$0xff]
      %v403 = vld [vmem:[%s2] sm:$0x1]
      %v405 = vlaneseq
      %v406 = vshrl.u32 %v405, 7
      %v407 = vsub.s32 0, %v406
      %v408 = vrot.slane %v403, %v407
      %vm410 = vcmask 130048
      %v412 = vsel %vm410, %v385, 0
      %v415 = vsel %vm410, %v386, 0
      %v418 = vsel %vm410, %v387, 0
      %v421 = vsel %vm410, %v388, 0
      %v424 = vsel %vm410, %v389, 0
      %v427 = vsel %vm410, %v390, 0
      %v430 = vsel %vm410, %v391, 0
      %v433 = vsel %vm410, %v392, 0
      %v436 = vsel %vm410, %v393, 0
      %v439 = vsel %vm410, %v394, 0
      %v442 = vsel %vm410, %v395, 0
      %v445 = vsel %vm410, %v396, 0
      %v448 = vsel %vm410, %v397, 0
      %v451 = vsel %vm410, %v398, 0
      %v454 = vsel %vm410, %v399, 0
      %v457 = vsel %vm410, %v400, 0
      %459 = vmatprep.subr.mxu0 0.0
      %460 = vmatpush1.msra.mxu0 %v401
      %461 = vmatprep.subr.mxu0 0.0
      %462 = vmatpush1.msra.mxu0 %v402
      %463 = vmatprep.subr.mxu0 0.0
      %464 = vmatpush1.msra.mxu0 0.0
      %465 = vmatprep.subr.mxu0 0.0
      %466 = vmatpush1.msra.mxu0 0.0
      %467 = vmatprep.subr.mxu0 0.0
      %468 = vmatpush1.msra.mxu0 0.0
      %469 = vmatprep.subr.mxu0 0.0
      %470 = vmatpush1.msra.mxu0 0.0
      %471 = vmatprep.subr.mxu0 0.0
      %472 = vmatpush1.msra.mxu0 0.0
      %473 = vmatprep.subr.mxu0 0.0
      %474 = vmatpush1.msra.mxu0 0.0
      %475 = vmatprep.subr.mxu0 0.0
      %476 = vmatpush1.msra.mxu0 0.0
      %477 = vmatprep.subr.mxu0 0.0
      %478 = vmatpush1.msra.mxu0 0.0
      %479 = vmatprep.subr.mxu0 0.0
      %480 = vmatpush1.msra.mxu0 0.0
      %481 = vmatprep.subr.mxu0 0.0
      %482 = vmatpush1.msra.mxu0 0.0
      %483 = vmatprep.subr.mxu0 0.0
      %484 = vmatpush1.msra.mxu0 0.0
      %485 = vmatprep.subr.mxu0 0.0
      %486 = vmatpush1.msra.mxu0 0.0
      %487 = vmatprep.subr.mxu0 0.0
      %488 = vmatpush1.msra.mxu0 0.0
      %489 = vmatprep.subr.mxu0 0.0
      %490 = vmatpush1.msra.mxu0 0.0
      %491 = vmatprep.subr.mxu0 0.0
      %492 = vmatpush1.msra.mxu0 0.0
      %493 = vmatprep.subr.mxu0 0.0
      %494 = vmatpush1.msra.mxu0 0.0
      %495 = vmatprep.subr.mxu0 0.0
      %496 = vmatpush1.msra.mxu0 0.0
      %497 = vmatprep.subr.mxu0 0.0
      %498 = vmatpush1.msra.mxu0 0.0
      %499 = vmatprep.subr.mxu0 0.0
      %500 = vmatpush1.msra.mxu0 0.0
      %501 = vmatprep.subr.mxu0 0.0
      %502 = vmatpush1.msra.mxu0 0.0
      %503 = vmatprep.subr.mxu0 0.0
      %504 = vmatpush1.msra.mxu0 0.0
      %505 = vmatprep.subr.mxu0 0.0
      %506 = vmatpush1.msra.mxu0 0.0
      %507 = vmatprep.subr.mxu0 0.0
      %508 = vmatpush1.msra.mxu0 0.0
      %509 = vmatprep.subr.mxu0 0.0
      %510 = vmatpush1.msra.mxu0 0.0
      %511 = vmatprep.subr.mxu0 0.0
      %512 = vmatpush1.msra.mxu0 0.0
      %513 = vmatprep.subr.mxu0 0.0
      %514 = vmatpush1.msra.mxu0 0.0
      %515 = vmatprep.subr.mxu0 0.0
      %516 = vmatpush1.msra.mxu0 0.0
      %517 = vmatprep.subr.mxu0 0.0
      %518 = vmatpush1.msra.mxu0 0.0
      %519 = vmatprep.subr.mxu0 0.0
      %520 = vmatpush1.msra.mxu0 0.0
      %521 = vmatprep.subr.mxu0 0.0
      %522 = vmatpush1.msra.mxu0 0.0
      %523 = vmatprep.mubr.f32.mxu0 0.0
      %524 = vmatmul.mubr.f32.gmra.mrb[0].mxu0 %v412
      %v525 = vpop.f32.mrb[0].mxu0
      %v526 = vadd.f32 %v408, %v525
      %v527 = vpop.f32.mrb[0].mxu0
      %528 = vmatprep.mubr.f32.mxu0 0.0
      %529 = vmatmul.mubr.f32.gmra.mrb[0].mxu0 %v415
      %v530 = vpop.f32.mrb[0].mxu0
      %v531 = vadd.f32 %v408, %v530
      %v532 = vpop.f32.mrb[0].mxu0
      %533 = vmatprep.mubr.f32.mxu0 0.0
      %534 = vmatmul.mubr.f32.gmra.mrb[0].mxu0 %v418
      %v535 = vpop.f32.mrb[0].mxu0
      %v536 = vadd.f32 %v408, %v535
      %v537 = vpop.f32.mrb[0].mxu0
      %538 = vmatprep.mubr.f32.mxu0 0.0
      %539 = vmatmul.mubr.f32.gmra.mrb[0].mxu0 %v421
      %v540 = vpop.f32.mrb[0].mxu0
      %v541 = vadd.f32 %v408, %v540
      %v542 = vpop.f32.mrb[0].mxu0
      %543 = vmatprep.mubr.f32.mxu0 0.0
      %544 = vmatmul.mubr.f32.gmra.mrb[0].mxu0 %v424
      %v545 = vpop.f32.mrb[0].mxu0
      %v546 = vadd.f32 %v408, %v545
      %v547 = vpop.f32.mrb[0].mxu0
      %548 = vmatprep.mubr.f32.mxu0 0.0
      %549 = vmatmul.mubr.f32.gmra.mrb[0].mxu0 %v427
      %v550 = vpop.f32.mrb[0].mxu0
      %v551 = vadd.f32 %v408, %v550
      %v552 = vpop.f32.mrb[0].mxu0
      %553 = vmatprep.mubr.f32.mxu0 0.0
      %554 = vmatmul.mubr.f32.gmra.mrb[0].mxu0 %v430
      %v555 = vpop.f32.mrb[0].mxu0
      %v556 = vadd.f32 %v408, %v555
      %v557 = vpop.f32.mrb[0].mxu0
      %558 = vmatprep.mubr.f32.mxu0 0.0
      %559 = vmatmul.mubr.f32.gmra.mrb[0].mxu0 %v433
      %v560 = vpop.f32.mrb[0].mxu0
      %v561 = vadd.f32 %v408, %v560
      %v562 = vpop.f32.mrb[0].mxu0
      %563 = vmatprep.mubr.f32.mxu0 0.0
      %564 = vmatmul.mubr.f32.gmra.mrb[0].mxu0 %v436
      %v565 = vpop.f32.mrb[0].mxu0
      %v566 = vadd.f32 %v408, %v565
      %v567 = vpop.f32.mrb[0].mxu0
      %568 = vmatprep.mubr.f32.mxu0 0.0
      %569 = vmatmul.mubr.f32.gmra.mrb[0].mxu0 %v439
      %v570 = vpop.f32.mrb[0].mxu0
      %v571 = vadd.f32 %v408, %v570
      %v572 = vpop.f32.mrb[0].mxu0
      %573 = vmatprep.mubr.f32.mxu0 0.0
      %574 = vmatmul.mubr.f32.gmra.mrb[0].mxu0 %v442
      %v575 = vpop.f32.mrb[0].mxu0
      %v576 = vadd.f32 %v408, %v575
      %v577 = vpop.f32.mrb[0].mxu0
      %578 = vmatprep.mubr.f32.mxu0 0.0
      %579 = vmatmul.mubr.f32.gmra.mrb[0].mxu0 %v445
      %v580 = vpop.f32.mrb[0].mxu0
      %v581 = vadd.f32 %v408, %v580
      %v582 = vpop.f32.mrb[0].mxu0
      %583 = vmatprep.mubr.f32.mxu0 0.0
      %584 = vmatmul.mubr.f32.gmra.mrb[0].mxu0 %v448
      %v585 = vpop.f32.mrb[0].mxu0
      %v586 = vadd.f32 %v408, %v585
      %v587 = vpop.f32.mrb[0].mxu0
      %588 = vmatprep.mubr.f32.mxu0 0.0
      %589 = vmatmul.mubr.f32.gmra.mrb[0].mxu0 %v451
      %v590 = vpop.f32.mrb[0].mxu0
      %v591 = vadd.f32 %v408, %v590
      %v592 = vpop.f32.mrb[0].mxu0
      %593 = vmatprep.mubr.f32.mxu0 0.0
      %594 = vmatmul.mubr.f32.gmra.mrb[0].mxu0 %v454
      %v595 = vpop.f32.mrb[0].mxu0
      %v596 = vadd.f32 %v408, %v595
      %v597 = vpop.f32.mrb[0].mxu0
      %598 = vmatprep.mubr.f32.mxu0 0.0
      %599 = vmatmul.mubr.f32.gmra.mrb[0].mxu0 %v457
      %v600 = vpop.f32.mrb[0].mxu0
      %v601 = vadd.f32 %v408, %v600
      %v602 = vpop.f32.mrb[0].mxu0
      %603 = vdwg.mxu0
      %v604 = vmax.f32 %v526, 0.0
      %v605 = vmax.f32 %v531, 0.0
      %v606 = vmax.f32 %v536, 0.0
      %v607 = vmax.f32 %v541, 0.0
      %v608 = vmax.f32 %v546, 0.0
      %v609 = vmax.f32 %v551, 0.0
      %v610 = vmax.f32 %v556, 0.0
      %v611 = vmax.f32 %v561, 0.0
      %v612 = vmax.f32 %v566, 0.0
      %v613 = vmax.f32 %v571, 0.0
      %v614 = vmax.f32 %v576, 0.0
      %v615 = vmax.f32 %v581, 0.0
      %v616 = vmax.f32 %v586, 0.0
      %v617 = vmax.f32 %v591, 0.0
      %v618 = vmax.f32 %v596, 0.0
      %v619 = vmax.f32 %v601, 0.0
      %vm620 = vcmask 261120
      %v621 = vsel %vm620, %v604, 0.0
      %622 = vadd.xlane.f32.xlu0 %v621
      %v623 = vpop.xlane.xlu0 %622
      %v624 = vsel %vm620, %v605, 0.0
      %625 = vadd.xlane.f32.xlu0 %v624
      %v626 = vpop.xlane.xlu0 %625
      %v627 = vsel %vm620, %v606, 0.0
      %628 = vadd.xlane.f32.xlu0 %v627
      %v629 = vpop.xlane.xlu0 %628
      %v630 = vsel %vm620, %v607, 0.0
      %631 = vadd.xlane.f32.xlu0 %v630
      %v632 = vpop.xlane.xlu0 %631
      %v633 = vsel %vm620, %v608, 0.0
      %634 = vadd.xlane.f32.xlu0 %v633
      %v635 = vpop.xlane.xlu0 %634
      %v636 = vsel %vm620, %v609, 0.0
      %637 = vadd.xlane.f32.xlu0 %v636
      %v638 = vpop.xlane.xlu0 %637
      %v639 = vsel %vm620, %v610, 0.0
      %640 = vadd.xlane.f32.xlu0 %v639
      %v641 = vpop.xlane.xlu0 %640
      %v642 = vsel %vm620, %v611, 0.0
      %643 = vadd.xlane.f32.xlu0 %v642
      %v644 = vpop.xlane.xlu0 %643
      %v645 = vsel %vm620, %v612, 0.0
      %646 = vadd.xlane.f32.xlu0 %v645
      %v647 = vpop.xlane.xlu0 %646
      %v648 = vsel %vm620, %v613, 0.0
      %649 = vadd.xlane.f32.xlu0 %v648
      %v650 = vpop.xlane.xlu0 %649
      %v651 = vsel %vm620, %v614, 0.0
      %652 = vadd.xlane.f32.xlu0 %v651
      %v653 = vpop.xlane.xlu0 %652
      %v654 = vsel %vm620, %v615, 0.0
      %655 = vadd.xlane.f32.xlu0 %v654
      %v656 = vpop.xlane.xlu0 %655
      %v657 = vsel %vm620, %v616, 0.0
      %658 = vadd.xlane.f32.xlu0 %v657
      %v659 = vpop.xlane.xlu0 %658
      %v660 = vsel %vm620, %v617, 0.0
      %661 = vadd.xlane.f32.xlu0 %v660
      %v662 = vpop.xlane.xlu0 %661
      %v663 = vsel %vm620, %v618, 0.0
      %664 = vadd.xlane.f32.xlu0 %v663
      %v665 = vpop.xlane.xlu0 %664
      %v666 = vsel %vm620, %v619, 0.0
      %667 = vadd.xlane.f32.xlu0 %v666
      %v668 = vpop.xlane.xlu0 %667
      %v669 = vrcp.pop 32.0
      %v670 = vmul.f32 %v623, %v669
      %v671 = vmul.f32 %v626, %v669
      %v672 = vmul.f32 %v629, %v669
      %v673 = vmul.f32 %v632, %v669
      %v674 = vmul.f32 %v635, %v669
      %v675 = vmul.f32 %v638, %v669
      %v676 = vmul.f32 %v641, %v669
      %v677 = vmul.f32 %v644, %v669
      %v678 = vmul.f32 %v647, %v669
      %v679 = vmul.f32 %v650, %v669
      %v680 = vmul.f32 %v653, %v669
      %v681 = vmul.f32 %v656, %v669
      %v682 = vmul.f32 %v659, %v669
      %v683 = vmul.f32 %v662, %v669
      %v684 = vmul.f32 %v665, %v669
      %v685 = vmul.f32 %v668, %v669
      %v686 = vsub.f32 %v604, %v670
      %v687 = vsub.f32 %v605, %v671
      %v688 = vsub.f32 %v606, %v672
      %v689 = vsub.f32 %v607, %v673
      %v690 = vsub.f32 %v608, %v674
      %v691 = vsub.f32 %v609, %v675
      %v692 = vsub.f32 %v610, %v676
      %v693 = vsub.f32 %v611, %v677
      %v694 = vsub.f32 %v612, %v678
      %v695 = vsub.f32 %v613, %v679
      %v696 = vsub.f32 %v614, %v680
      %v697 = vsub.f32 %v615, %v681
      %v698 = vsub.f32 %v616, %v682
      %v699 = vsub.f32 %v617, %v683
      %v700 = vsub.f32 %v618, %v684
      %v701 = vsub.f32 %v619, %v685
      %v702 = vmul.f32 %v686, %v686
      %v703 = vmul.f32 %v687, %v687
      %v704 = vmul.f32 %v688, %v688
      %v705 = vmul.f32 %v689, %v689
      %v706 = vmul.f32 %v690, %v690
      %v707 = vmul.f32 %v691, %v691
      %v708 = vmul.f32 %v692, %v692
      %v709 = vmul.f32 %v693, %v693
      %v710 = vmul.f32 %v694, %v694
      %v711 = vmul.f32 %v695, %v695
      %v712 = vmul.f32 %v696, %v696
      %v713 = vmul.f32 %v697, %v697
      %v714 = vmul.f32 %v698, %v698
      %v715 = vmul.f32 %v699, %v699
      %v716 = vmul.f32 %v700, %v700
      %v717 = vmul.f32 %v701, %v701
      %v718 = vsel %vm620, %v702, 0.0
      %719 = vadd.xlane.f32.xlu0 %v718
      %v720 = vpop.xlane.xlu0 %719
      %v721 = vsel %vm620, %v703, 0.0
      %722 = vadd.xlane.f32.xlu0 %v721
      %v723 = vpop.xlane.xlu0 %722
      %v724 = vsel %vm620, %v704, 0.0
      %725 = vadd.xlane.f32.xlu0 %v724
      %v726 = vpop.xlane.xlu0 %725
      %v727 = vsel %vm620, %v705, 0.0
      %728 = vadd.xlane.f32.xlu0 %v727
      %v729 = vpop.xlane.xlu0 %728
      %v730 = vsel %vm620, %v706, 0.0
      %731 = vadd.xlane.f32.xlu0 %v730
      %v732 = vpop.xlane.xlu0 %731
      %v733 = vsel %vm620, %v707, 0.0
      %734 = vadd.xlane.f32.xlu0 %v733
      %v735 = vpop.xlane.xlu0 %734
      %v736 = vsel %vm620, %v708, 0.0
      %737 = vadd.xlane.f32.xlu0 %v736
      %v738 = vpop.xlane.xlu0 %737
      %v739 = vsel %vm620, %v709, 0.0
      %740 = vadd.xlane.f32.xlu0 %v739
      %v741 = vpop.xlane.xlu0 %740
      %v742 = vsel %vm620, %v710, 0.0
      %743 = vadd.xlane.f32.xlu0 %v742
      %v744 = vpop.xlane.xlu0 %743
      %v745 = vsel %vm620, %v711, 0.0
      %746 = vadd.xlane.f32.xlu0 %v745
      %v747 = vpop.xlane.xlu0 %746
      %v748 = vsel %vm620, %v712, 0.0
      %749 = vadd.xlane.f32.xlu0 %v748
      %v750 = vpop.xlane.xlu0 %749
      %v751 = vsel %vm620, %v713, 0.0
      %752 = vadd.xlane.f32.xlu0 %v751
      %v753 = vpop.xlane.xlu0 %752
      %v754 = vsel %vm620, %v714, 0.0
      %755 = vadd.xlane.f32.xlu0 %v754
      %v756 = vpop.xlane.xlu0 %755
      %v757 = vsel %vm620, %v715, 0.0
      %758 = vadd.xlane.f32.xlu0 %v757
      %v759 = vpop.xlane.xlu0 %758
      %v760 = vsel %vm620, %v716, 0.0
      %761 = vadd.xlane.f32.xlu0 %v760
      %v762 = vpop.xlane.xlu0 %761
      %v763 = vsel %vm620, %v717, 0.0
      %764 = vadd.xlane.f32.xlu0 %v763
      %v765 = vpop.xlane.xlu0 %764
      %v766 = vmul.f32 %v720, %v669
      %v767 = vmul.f32 %v723, %v669
      %v768 = vmul.f32 %v726, %v669
      %v769 = vmul.f32 %v729, %v669
      %v770 = vmul.f32 %v732, %v669
      %v771 = vmul.f32 %v735, %v669
      %v772 = vmul.f32 %v738, %v669
      %v773 = vmul.f32 %v741, %v669
      %v774 = vmul.f32 %v744, %v669
      %v775 = vmul.f32 %v747, %v669
      %v776 = vmul.f32 %v750, %v669
      %v777 = vmul.f32 %v753, %v669
      %v778 = vmul.f32 %v756, %v669
      %v779 = vmul.f32 %v759, %v669
      %v780 = vmul.f32 %v762, %v669
      %v781 = vmul.f32 %v765, %v669
      %v782 = vadd.f32 %v766, 1e-05
      %v783 = vadd.f32 %v767, 1e-05
      %v784 = vadd.f32 %v768, 1e-05
      %v785 = vadd.f32 %v769, 1e-05
      %v786 = vadd.f32 %v770, 1e-05
      %v787 = vadd.f32 %v771, 1e-05
      %v788 = vadd.f32 %v772, 1e-05
      %v789 = vadd.f32 %v773, 1e-05
      %v790 = vadd.f32 %v774, 1e-05
      %v791 = vadd.f32 %v775, 1e-05
      %v792 = vadd.f32 %v776, 1e-05
      %v793 = vadd.f32 %v777, 1e-05
      %v794 = vadd.f32 %v778, 1e-05
      %v795 = vadd.f32 %v779, 1e-05
      %v796 = vadd.f32 %v780, 1e-05
      %v797 = vadd.f32 %v781, 1e-05
      %v798 = vrsqrt.pop %v782
      %v799 = vrsqrt.pop %v783
      %v800 = vrsqrt.pop %v784
      %v801 = vrsqrt.pop %v785
      %v802 = vrsqrt.pop %v786
      %v803 = vrsqrt.pop %v787
      %v804 = vrsqrt.pop %v788
      %v805 = vrsqrt.pop %v789
      %v806 = vrsqrt.pop %v790
      %v807 = vrsqrt.pop %v791
      %v808 = vrsqrt.pop %v792
      %v809 = vrsqrt.pop %v793
      %v810 = vrsqrt.pop %v794
      %v811 = vrsqrt.pop %v795
      %v812 = vrsqrt.pop %v796
      %v813 = vrsqrt.pop %v797
      %v814 = vmul.f32 %v686, %v798
      %v815 = vmul.f32 %v687, %v799
      %v816 = vmul.f32 %v688, %v800
      %v817 = vmul.f32 %v689, %v801
      %v818 = vmul.f32 %v690, %v802
      %v819 = vmul.f32 %v691, %v803
      %v820 = vmul.f32 %v692, %v804
      %v821 = vmul.f32 %v693, %v805
      %v822 = vmul.f32 %v694, %v806
      %v823 = vmul.f32 %v695, %v807
      %v824 = vmul.f32 %v696, %v808
      %v825 = vmul.f32 %v697, %v809
      %v826 = vmul.f32 %v698, %v810
      %v827 = vmul.f32 %v699, %v811
      %v828 = vmul.f32 %v700, %v812
      %v829 = vmul.f32 %v701, %v813
      %v830 = vld [vmem:[%s3] sm:$0xff]
      %v831 = vld [vmem:[%s3 + $0x8] sm:$0xff]
      %v832 = vld [vmem:[%s3 + $0x10] sm:$0xff]
      %v833 = vld [vmem:[%s3 + $0x18] sm:$0xff]
      %v834 = vld [vmem:[%s4] sm:$0x1]
      %v836 = vlaneseq
      %v837 = vshrl.u32 %v836, 7
      %v838 = vsub.s32 0, %v837
      %v839 = vrot.slane %v834, %v838
      %v842 = vsel %vm620, %v814, 0
      %v845 = vsel %vm620, %v815, 0
      %v848 = vsel %vm620, %v816, 0
      %v851 = vsel %vm620, %v817, 0
      %v854 = vsel %vm620, %v818, 0
      %v857 = vsel %vm620, %v819, 0
      %v860 = vsel %vm620, %v820, 0
      %v863 = vsel %vm620, %v821, 0
      %v866 = vsel %vm620, %v822, 0
      %v869 = vsel %vm620, %v823, 0
      %v872 = vsel %vm620, %v824, 0
      %v875 = vsel %vm620, %v825, 0
      %v878 = vsel %vm620, %v826, 0
      %v881 = vsel %vm620, %v827, 0
      %v884 = vsel %vm620, %v828, 0
      %v887 = vsel %vm620, %v829, 0
      %889 = vmatprep.subr.mxu0 0.0
      %890 = vmatpush1.msra.mxu0 %v830
      %891 = vmatprep.subr.mxu0 0.0
      %892 = vmatpush1.msra.mxu0 %v831
      %893 = vmatprep.subr.mxu0 0.0
      %894 = vmatpush1.msra.mxu0 %v832
      %895 = vmatprep.subr.mxu0 0.0
      %896 = vmatpush1.msra.mxu0 %v833
      %897 = vmatprep.subr.mxu0 0.0
      %898 = vmatpush1.msra.mxu0 0.0
      %899 = vmatprep.subr.mxu0 0.0
      %900 = vmatpush1.msra.mxu0 0.0
      %901 = vmatprep.subr.mxu0 0.0
      %902 = vmatpush1.msra.mxu0 0.0
      %903 = vmatprep.subr.mxu0 0.0
      %904 = vmatpush1.msra.mxu0 0.0
      %905 = vmatprep.subr.mxu0 0.0
      %906 = vmatpush1.msra.mxu0 0.0
      %907 = vmatprep.subr.mxu0 0.0
      %908 = vmatpush1.msra.mxu0 0.0
      %909 = vmatprep.subr.mxu0 0.0
      %910 = vmatpush1.msra.mxu0 0.0
      %911 = vmatprep.subr.mxu0 0.0
      %912 = vmatpush1.msra.mxu0 0.0
      %913 = vmatprep.subr.mxu0 0.0
      %914 = vmatpush1.msra.mxu0 0.0
      %915 = vmatprep.subr.mxu0 0.0
      %916 = vmatpush1.msra.mxu0 0.0
      %917 = vmatprep.subr.mxu0 0.0
      %918 = vmatpush1.msra.mxu0 0.0
      %919 = vmatprep.subr.mxu0 0.0
      %920 = vmatpush1.msra.mxu0 0.0
      %921 = vmatprep.subr.mxu0 0.0
      %922 = vmatpush1.msra.mxu0 0.0
      %923 = vmatprep.subr.mxu0 0.0
      %924 = vmatpush1.msra.mxu0 0.0
      %925 = vmatprep.subr.mxu0 0.0
      %926 = vmatpush1.msra.mxu0 0.0
      %927 = vmatprep.subr.mxu0 0.0
      %928 = vmatpush1.msra.mxu0 0.0
      %929 = vmatprep.subr.mxu0 0.0
      %930 = vmatpush1.msra.mxu0 0.0
      %931 = vmatprep.subr.mxu0 0.0
      %932 = vmatpush1.msra.mxu0 0.0
      %933 = vmatprep.subr.mxu0 0.0
      %934 = vmatpush1.msra.mxu0 0.0
      %935 = vmatprep.subr.mxu0 0.0
      %936 = vmatpush1.msra.mxu0 0.0
      %937 = vmatprep.subr.mxu0 0.0
      %938 = vmatpush1.msra.mxu0 0.0
      %939 = vmatprep.subr.mxu0 0.0
      %940 = vmatpush1.msra.mxu0 0.0
      %941 = vmatprep.subr.mxu0 0.0
      %942 = vmatpush1.msra.mxu0 0.0
      %943 = vmatprep.subr.mxu0 0.0
      %944 = vmatpush1.msra.mxu0 0.0
      %945 = vmatprep.subr.mxu0 0.0
      %946 = vmatpush1.msra.mxu0 0.0
      %947 = vmatprep.subr.mxu0 0.0
      %948 = vmatpush1.msra.mxu0 0.0
      %949 = vmatprep.subr.mxu0 0.0
      %950 = vmatpush1.msra.mxu0 0.0
      %951 = vmatprep.subr.mxu0 0.0
      %952 = vmatpush1.msra.mxu0 0.0
      %953 = vmatprep.mubr.f32.mxu0 0.0
      %954 = vmatmul.mubr.f32.gmra.mrb[0].mxu0 %v842
      %v955 = vpop.f32.mrb[0].mxu0
      %v956 = vadd.f32 %v839, %v955
      %v957 = vpop.f32.mrb[0].mxu0
      %958 = vmatprep.mubr.f32.mxu0 0.0
      %959 = vmatmul.mubr.f32.gmra.mrb[0].mxu0 %v845
      %v960 = vpop.f32.mrb[0].mxu0
      %v961 = vadd.f32 %v839, %v960
      %v962 = vpop.f32.mrb[0].mxu0
      %963 = vmatprep.mubr.f32.mxu0 0.0
      %964 = vmatmul.mubr.f32.gmra.mrb[0].mxu0 %v848
      %v965 = vpop.f32.mrb[0].mxu0
      %v966 = vadd.f32 %v839, %v965
      %v967 = vpop.f32.mrb[0].mxu0
      %968 = vmatprep.mubr.f32.mxu0 0.0
      %969 = vmatmul.mubr.f32.gmra.mrb[0].mxu0 %v851
      %v970 = vpop.f32.mrb[0].mxu0
      %v971 = vadd.f32 %v839, %v970
      %v972 = vpop.f32.mrb[0].mxu0
      %973 = vmatprep.mubr.f32.mxu0 0.0
      %974 = vmatmul.mubr.f32.gmra.mrb[0].mxu0 %v854
      %v975 = vpop.f32.mrb[0].mxu0
      %v976 = vadd.f32 %v839, %v975
      %v977 = vpop.f32.mrb[0].mxu0
      %978 = vmatprep.mubr.f32.mxu0 0.0
      %979 = vmatmul.mubr.f32.gmra.mrb[0].mxu0 %v857
      %v980 = vpop.f32.mrb[0].mxu0
      %v981 = vadd.f32 %v839, %v980
      %v982 = vpop.f32.mrb[0].mxu0
      %983 = vmatprep.mubr.f32.mxu0 0.0
      %984 = vmatmul.mubr.f32.gmra.mrb[0].mxu0 %v860
      %v985 = vpop.f32.mrb[0].mxu0
      %v986 = vadd.f32 %v839, %v985
      %v987 = vpop.f32.mrb[0].mxu0
      %988 = vmatprep.mubr.f32.mxu0 0.0
      %989 = vmatmul.mubr.f32.gmra.mrb[0].mxu0 %v863
      %v990 = vpop.f32.mrb[0].mxu0
      %v991 = vadd.f32 %v839, %v990
      %v992 = vpop.f32.mrb[0].mxu0
      %993 = vmatprep.mubr.f32.mxu0 0.0
      %994 = vmatmul.mubr.f32.gmra.mrb[0].mxu0 %v866
      %v995 = vpop.f32.mrb[0].mxu0
      %v996 = vadd.f32 %v839, %v995
      %v997 = vpop.f32.mrb[0].mxu0
      %998 = vmatprep.mubr.f32.mxu0 0.0
      %999 = vmatmul.mubr.f32.gmra.mrb[0].mxu0 %v869
      %v1000 = vpop.f32.mrb[0].mxu0
      %v1001 = vadd.f32 %v839, %v1000
      %v1002 = vpop.f32.mrb[0].mxu0
      %1003 = vmatprep.mubr.f32.mxu0 0.0
      %1004 = vmatmul.mubr.f32.gmra.mrb[0].mxu0 %v872
      %v1005 = vpop.f32.mrb[0].mxu0
      %v1006 = vadd.f32 %v839, %v1005
      %v1007 = vpop.f32.mrb[0].mxu0
      %1008 = vmatprep.mubr.f32.mxu0 0.0
      %1009 = vmatmul.mubr.f32.gmra.mrb[0].mxu0 %v875
      %v1010 = vpop.f32.mrb[0].mxu0
      %v1011 = vadd.f32 %v839, %v1010
      %v1012 = vpop.f32.mrb[0].mxu0
      %1013 = vmatprep.mubr.f32.mxu0 0.0
      %1014 = vmatmul.mubr.f32.gmra.mrb[0].mxu0 %v878
      %v1015 = vpop.f32.mrb[0].mxu0
      %v1016 = vadd.f32 %v839, %v1015
      %v1017 = vpop.f32.mrb[0].mxu0
      %1018 = vmatprep.mubr.f32.mxu0 0.0
      %1019 = vmatmul.mubr.f32.gmra.mrb[0].mxu0 %v881
      %v1020 = vpop.f32.mrb[0].mxu0
      %v1021 = vadd.f32 %v839, %v1020
      %v1022 = vpop.f32.mrb[0].mxu0
      %1023 = vmatprep.mubr.f32.mxu0 0.0
      %1024 = vmatmul.mubr.f32.gmra.mrb[0].mxu0 %v884
      %v1025 = vpop.f32.mrb[0].mxu0
      %v1026 = vadd.f32 %v839, %v1025
      %v1027 = vpop.f32.mrb[0].mxu0
      %1028 = vmatprep.mubr.f32.mxu0 0.0
      %1029 = vmatmul.mubr.f32.gmra.mrb[0].mxu0 %v887
      %v1030 = vpop.f32.mrb[0].mxu0
      %v1031 = vadd.f32 %v839, %v1030
      %v1032 = vpop.f32.mrb[0].mxu0
      %1033 = vdwg.mxu0
      %v1034 = vld [vmem:[%s377] sm:$0xff]
      %v1035 = vld [vmem:[%s377 + $0x8] sm:$0xff]
      %v1036 = vld [vmem:[%s377 + $0x10] sm:$0xff]
      %v1037 = vld [vmem:[%s377 + $0x18] sm:$0xff]
      %v1038 = vld [vmem:[%s377 + $0x20] sm:$0xff]
      %v1039 = vld [vmem:[%s377 + $0x28] sm:$0xff]
      %v1040 = vld [vmem:[%s377 + $0x30] sm:$0xff]
      %v1041 = vld [vmem:[%s377 + $0x38] sm:$0xff]
      %v1042 = vld [vmem:[%s377 + $0x40] sm:$0xff]
      %v1043 = vld [vmem:[%s377 + $0x48] sm:$0xff]
      %v1044 = vld [vmem:[%s377 + $0x50] sm:$0xff]
      %v1045 = vld [vmem:[%s377 + $0x58] sm:$0xff]
      %v1046 = vld [vmem:[%s377 + $0x60] sm:$0xff]
      %v1047 = vld [vmem:[%s377 + $0x68] sm:$0xff]
      %v1048 = vld [vmem:[%s377 + $0x70] sm:$0xff]
      %v1049 = vld [vmem:[%s377 + $0x78] sm:$0xff]
      %v1050 = vmul.f32 %v956, 0.5
      %v1051 = vmul.f32 %v961, 0.5
      %v1052 = vmul.f32 %v966, 0.5
      %v1053 = vmul.f32 %v971, 0.5
      %v1054 = vmul.f32 %v976, 0.5
      %v1055 = vmul.f32 %v981, 0.5
      %v1056 = vmul.f32 %v986, 0.5
      %v1057 = vmul.f32 %v991, 0.5
      %v1058 = vmul.f32 %v996, 0.5
      %v1059 = vmul.f32 %v1001, 0.5
      %v1060 = vmul.f32 %v1006, 0.5
      %v1061 = vmul.f32 %v1011, 0.5
      %v1062 = vmul.f32 %v1016, 0.5
      %v1063 = vmul.f32 %v1021, 0.5
      %v1064 = vmul.f32 %v1026, 0.5
      %v1065 = vmul.f32 %v1031, 0.5
      %v1066 = vmul.f32 %v1050, 1.442695
      %v1067 = vpow.pop %v1066
      %v1068 = vmul.f32 %v1051, 1.442695
      %v1069 = vpow.pop %v1068
      %v1070 = vmul.f32 %v1052, 1.442695
      %v1071 = vpow.pop %v1070
      %v1072 = vmul.f32 %v1053, 1.442695
      %v1073 = vpow.pop %v1072
      %v1074 = vmul.f32 %v1054, 1.442695
      %v1075 = vpow.pop %v1074
      %v1076 = vmul.f32 %v1055, 1.442695
      %v1077 = vpow.pop %v1076
      %v1078 = vmul.f32 %v1056, 1.442695
      %v1079 = vpow.pop %v1078
      %v1080 = vmul.f32 %v1057, 1.442695
      %v1081 = vpow.pop %v1080
      %v1082 = vmul.f32 %v1058, 1.442695
      %v1083 = vpow.pop %v1082
      %v1084 = vmul.f32 %v1059, 1.442695
      %v1085 = vpow.pop %v1084
      %v1086 = vmul.f32 %v1060, 1.442695
      %v1087 = vpow.pop %v1086
      %v1088 = vmul.f32 %v1061, 1.442695
      %v1089 = vpow.pop %v1088
      %v1090 = vmul.f32 %v1062, 1.442695
      %v1091 = vpow.pop %v1090
      %v1092 = vmul.f32 %v1063, 1.442695
      %v1093 = vpow.pop %v1092
      %v1094 = vmul.f32 %v1064, 1.442695
      %v1095 = vpow.pop %v1094
      %v1096 = vmul.f32 %v1065, 1.442695
      %v1097 = vpow.pop %v1096
      %1114 = vrot.lane.b32.xlu0 %v1067, 126
      %v1115 = vpop.permute.xlu0 %1114
      %1116 = vrot.lane.b32.xlu0 %v1069, 126
      %v1117 = vpop.permute.xlu0 %1116
      %1118 = vrot.lane.b32.xlu0 %v1071, 126
      %v1119 = vpop.permute.xlu0 %1118
      %1120 = vrot.lane.b32.xlu0 %v1073, 126
      %v1121 = vpop.permute.xlu0 %1120
      %1122 = vrot.lane.b32.xlu0 %v1075, 126
      %v1123 = vpop.permute.xlu0 %1122
      %1124 = vrot.lane.b32.xlu0 %v1077, 126
      %v1125 = vpop.permute.xlu0 %1124
      %1126 = vrot.lane.b32.xlu0 %v1079, 126
      %v1127 = vpop.permute.xlu0 %1126
      %1128 = vrot.lane.b32.xlu0 %v1081, 126
      %v1129 = vpop.permute.xlu0 %1128
      %1130 = vrot.lane.b32.xlu0 %v1083, 126
      %v1131 = vpop.permute.xlu0 %1130
      %1132 = vrot.lane.b32.xlu0 %v1085, 126
      %v1133 = vpop.permute.xlu0 %1132
      %1134 = vrot.lane.b32.xlu0 %v1087, 126
      %v1135 = vpop.permute.xlu0 %1134
      %1136 = vrot.lane.b32.xlu0 %v1089, 126
      %v1137 = vpop.permute.xlu0 %1136
      %1138 = vrot.lane.b32.xlu0 %v1091, 126
      %v1139 = vpop.permute.xlu0 %1138
      %1140 = vrot.lane.b32.xlu0 %v1093, 126
      %v1141 = vpop.permute.xlu0 %1140
      %1142 = vrot.lane.b32.xlu0 %v1095, 126
      %v1143 = vpop.permute.xlu0 %1142
      %1144 = vrot.lane.b32.xlu0 %v1097, 126
      %v1145 = vpop.permute.xlu0 %1144
      %v1162 = vmul.f32 %v1034, %v1115
      %v1163 = vmul.f32 %v1035, %v1117
      %v1164 = vmul.f32 %v1036, %v1119
      %v1165 = vmul.f32 %v1037, %v1121
      %v1166 = vmul.f32 %v1038, %v1123
      %v1167 = vmul.f32 %v1039, %v1125
      %v1168 = vmul.f32 %v1040, %v1127
      %v1169 = vmul.f32 %v1041, %v1129
      %v1170 = vmul.f32 %v1042, %v1131
      %v1171 = vmul.f32 %v1043, %v1133
      %v1172 = vmul.f32 %v1044, %v1135
      %v1173 = vmul.f32 %v1045, %v1137
      %v1174 = vmul.f32 %v1046, %v1139
      %v1175 = vmul.f32 %v1047, %v1141
      %v1176 = vmul.f32 %v1048, %v1143
      %v1177 = vmul.f32 %v1049, %v1145
      %v1178 = vadd.f32 %v956, %v1162
      %v1179 = vadd.f32 %v961, %v1163
      %v1180 = vadd.f32 %v966, %v1164
      %v1181 = vadd.f32 %v971, %v1165
      %v1182 = vadd.f32 %v976, %v1166
      %v1183 = vadd.f32 %v981, %v1167
      %v1184 = vadd.f32 %v986, %v1168
      %v1185 = vadd.f32 %v991, %v1169
      %v1186 = vadd.f32 %v996, %v1170
      %v1187 = vadd.f32 %v1001, %v1171
      %v1188 = vadd.f32 %v1006, %v1172
      %v1189 = vadd.f32 %v1011, %v1173
      %v1190 = vadd.f32 %v1016, %v1174
      %v1191 = vadd.f32 %v1021, %v1175
      %v1192 = vadd.f32 %v1026, %v1176
      %v1193 = vadd.f32 %v1031, %v1177
      %v1194 = vld [vmem:[%s6] sm:$0x1]
      %v1195 = vld [vmem:[%s5] sm:$0x1]
      %1197 = vset.pattern.permute.xlu0 0
      %1198 = vperm.xlu0 %1197, %v1178
      %v1199 = vpop.permute.xlu0 %1198
      %1202 = vset.pattern.permute.xlu0 0
      %1203 = vperm.xlu0 %1202, %v1179
      %v1204 = vpop.permute.xlu0 %1203
      %1207 = vset.pattern.permute.xlu0 0
      %1208 = vperm.xlu0 %1207, %v1180
      %v1209 = vpop.permute.xlu0 %1208
      %1212 = vset.pattern.permute.xlu0 0
      %1213 = vperm.xlu0 %1212, %v1181
      %v1214 = vpop.permute.xlu0 %1213
      %1217 = vset.pattern.permute.xlu0 0
      %1218 = vperm.xlu0 %1217, %v1182
      %v1219 = vpop.permute.xlu0 %1218
      %1222 = vset.pattern.permute.xlu0 0
      %1223 = vperm.xlu0 %1222, %v1183
      %v1224 = vpop.permute.xlu0 %1223
      %1227 = vset.pattern.permute.xlu0 0
      %1228 = vperm.xlu0 %1227, %v1184
      %v1229 = vpop.permute.xlu0 %1228
      %1232 = vset.pattern.permute.xlu0 0
      %1233 = vperm.xlu0 %1232, %v1185
      %v1234 = vpop.permute.xlu0 %1233
      %1237 = vset.pattern.permute.xlu0 0
      %1238 = vperm.xlu0 %1237, %v1186
      %v1239 = vpop.permute.xlu0 %1238
      %1242 = vset.pattern.permute.xlu0 0
      %1243 = vperm.xlu0 %1242, %v1187
      %v1244 = vpop.permute.xlu0 %1243
      %1247 = vset.pattern.permute.xlu0 0
      %1248 = vperm.xlu0 %1247, %v1188
      %v1249 = vpop.permute.xlu0 %1248
      %1252 = vset.pattern.permute.xlu0 0
      %1253 = vperm.xlu0 %1252, %v1189
      %v1254 = vpop.permute.xlu0 %1253
      %1257 = vset.pattern.permute.xlu0 0
      %1258 = vperm.xlu0 %1257, %v1190
      %v1259 = vpop.permute.xlu0 %1258
      %1262 = vset.pattern.permute.xlu0 0
      %1263 = vperm.xlu0 %1262, %v1191
      %v1264 = vpop.permute.xlu0 %1263
      %1267 = vset.pattern.permute.xlu0 0
      %1268 = vperm.xlu0 %1267, %v1192
      %v1269 = vpop.permute.xlu0 %1268
      %1272 = vset.pattern.permute.xlu0 0
      %1273 = vperm.xlu0 %1272, %v1193
      %v1274 = vpop.permute.xlu0 %1273
      %v1276 = vlaneseq
      %v1277 = vshrl.u32 %v1276, 7
      %v1278 = vsub.s32 0, %v1277
      %v1279 = vrot.slane %v1195, %v1278
      %v1280 = vmul.f32 %v1199, %v1279
      %v1281 = vmul.f32 %v1204, %v1279
      %v1282 = vmul.f32 %v1209, %v1279
      %v1283 = vmul.f32 %v1214, %v1279
      %v1284 = vmul.f32 %v1219, %v1279
      %v1285 = vmul.f32 %v1224, %v1279
      %v1286 = vmul.f32 %v1229, %v1279
      %v1287 = vmul.f32 %v1234, %v1279
      %v1288 = vmul.f32 %v1239, %v1279
      %v1289 = vmul.f32 %v1244, %v1279
      %v1290 = vmul.f32 %v1249, %v1279
      %v1291 = vmul.f32 %v1254, %v1279
      %v1292 = vmul.f32 %v1259, %v1279
      %v1293 = vmul.f32 %v1264, %v1279
      %v1294 = vmul.f32 %v1269, %v1279
      %v1295 = vmul.f32 %v1274, %v1279
      %v1297 = vlaneseq
      %v1298 = vshrl.u32 %v1297, 7
      %v1299 = vsub.s32 0, %v1298
      %v1300 = vrot.slane %v1194, %v1299
      %v1302 = vadd.f32 %v1300, %v1280
      %v1303 = vadd.f32 %v1300, %v1281
      %v1304 = vadd.f32 %v1300, %v1282
      %v1305 = vadd.f32 %v1300, %v1283
      %v1306 = vadd.f32 %v1300, %v1284
      %v1307 = vadd.f32 %v1300, %v1285
      %v1308 = vadd.f32 %v1300, %v1286
      %v1309 = vadd.f32 %v1300, %v1287
      %v1310 = vadd.f32 %v1300, %v1288
      %v1311 = vadd.f32 %v1300, %v1289
      %v1312 = vadd.f32 %v1300, %v1290
      %v1313 = vadd.f32 %v1300, %v1291
      %v1314 = vadd.f32 %v1300, %v1292
      %v1315 = vadd.f32 %v1300, %v1293
      %v1316 = vadd.f32 %v1300, %v1294
      %v1317 = vadd.f32 %v1300, %v1295
      %v1318 = vld [vmem:[%s5 + $0x1] sm:$0x1]
      %1319 = vset.pattern.permute.xlu0 1
      %1320 = vperm.xlu0 %1319, %v1178
      %v1321 = vpop.permute.xlu0 %1320
      %1323 = vset.pattern.permute.xlu0 1
      %1324 = vperm.xlu0 %1323, %v1179
      %v1325 = vpop.permute.xlu0 %1324
      %1327 = vset.pattern.permute.xlu0 1
      %1328 = vperm.xlu0 %1327, %v1180
      %v1329 = vpop.permute.xlu0 %1328
      %1331 = vset.pattern.permute.xlu0 1
      %1332 = vperm.xlu0 %1331, %v1181
      %v1333 = vpop.permute.xlu0 %1332
      %1335 = vset.pattern.permute.xlu0 1
      %1336 = vperm.xlu0 %1335, %v1182
      %v1337 = vpop.permute.xlu0 %1336
      %1339 = vset.pattern.permute.xlu0 1
      %1340 = vperm.xlu0 %1339, %v1183
      %v1341 = vpop.permute.xlu0 %1340
      %1343 = vset.pattern.permute.xlu0 1
      %1344 = vperm.xlu0 %1343, %v1184
      %v1345 = vpop.permute.xlu0 %1344
      %1347 = vset.pattern.permute.xlu0 1
      %1348 = vperm.xlu0 %1347, %v1185
      %v1349 = vpop.permute.xlu0 %1348
      %1351 = vset.pattern.permute.xlu0 1
      %1352 = vperm.xlu0 %1351, %v1186
      %v1353 = vpop.permute.xlu0 %1352
      %1355 = vset.pattern.permute.xlu0 1
      %1356 = vperm.xlu0 %1355, %v1187
      %v1357 = vpop.permute.xlu0 %1356
      %1359 = vset.pattern.permute.xlu0 1
      %1360 = vperm.xlu0 %1359, %v1188
      %v1361 = vpop.permute.xlu0 %1360
      %1363 = vset.pattern.permute.xlu0 1
      %1364 = vperm.xlu0 %1363, %v1189
      %v1365 = vpop.permute.xlu0 %1364
      %1367 = vset.pattern.permute.xlu0 1
      %1368 = vperm.xlu0 %1367, %v1190
      %v1369 = vpop.permute.xlu0 %1368
      %1371 = vset.pattern.permute.xlu0 1
      %1372 = vperm.xlu0 %1371, %v1191
      %v1373 = vpop.permute.xlu0 %1372
      %1375 = vset.pattern.permute.xlu0 1
      %1376 = vperm.xlu0 %1375, %v1192
      %v1377 = vpop.permute.xlu0 %1376
      %1379 = vset.pattern.permute.xlu0 1
      %1380 = vperm.xlu0 %1379, %v1193
      %v1381 = vpop.permute.xlu0 %1380
      %v1383 = vlaneseq
      %v1384 = vshrl.u32 %v1383, 7
      %v1385 = vsub.s32 0, %v1384
      %v1386 = vrot.slane %v1318, %v1385
      %v1387 = vmul.f32 %v1321, %v1386
      %v1388 = vmul.f32 %v1325, %v1386
      %v1389 = vmul.f32 %v1329, %v1386
      %v1390 = vmul.f32 %v1333, %v1386
      %v1391 = vmul.f32 %v1337, %v1386
      %v1392 = vmul.f32 %v1341, %v1386
      %v1393 = vmul.f32 %v1345, %v1386
      %v1394 = vmul.f32 %v1349, %v1386
      %v1395 = vmul.f32 %v1353, %v1386
      %v1396 = vmul.f32 %v1357, %v1386
      %v1397 = vmul.f32 %v1361, %v1386
      %v1398 = vmul.f32 %v1365, %v1386
      %v1399 = vmul.f32 %v1369, %v1386
      %v1400 = vmul.f32 %v1373, %v1386
      %v1401 = vmul.f32 %v1377, %v1386
      %v1402 = vmul.f32 %v1381, %v1386
      %v1403 = vadd.f32 %v1302, %v1387
      %v1404 = vadd.f32 %v1303, %v1388
      %v1405 = vadd.f32 %v1304, %v1389
      %v1406 = vadd.f32 %v1305, %v1390
      %v1407 = vadd.f32 %v1306, %v1391
      %v1408 = vadd.f32 %v1307, %v1392
      %v1409 = vadd.f32 %v1308, %v1393
      %v1410 = vadd.f32 %v1309, %v1394
      %v1411 = vadd.f32 %v1310, %v1395
      %v1412 = vadd.f32 %v1311, %v1396
      %v1413 = vadd.f32 %v1312, %v1397
      %v1414 = vadd.f32 %v1313, %v1398
      %v1415 = vadd.f32 %v1314, %v1399
      %v1416 = vadd.f32 %v1315, %v1400
      %v1417 = vadd.f32 %v1316, %v1401
      %v1418 = vadd.f32 %v1317, %v1402
      %v1419 = vmax.f32 %v1403, 0.0
      %v1420 = vmax.f32 %v1404, 0.0
      %v1421 = vmax.f32 %v1405, 0.0
      %v1422 = vmax.f32 %v1406, 0.0
      %v1423 = vmax.f32 %v1407, 0.0
      %v1424 = vmax.f32 %v1408, 0.0
      %v1425 = vmax.f32 %v1409, 0.0
      %v1426 = vmax.f32 %v1410, 0.0
      %v1427 = vmax.f32 %v1411, 0.0
      %v1428 = vmax.f32 %v1412, 0.0
      %v1429 = vmax.f32 %v1413, 0.0
      %v1430 = vmax.f32 %v1414, 0.0
      %v1431 = vmax.f32 %v1415, 0.0
      %v1432 = vmax.f32 %v1416, 0.0
      %v1433 = vmax.f32 %v1417, 0.0
      %v1434 = vmax.f32 %v1418, 0.0
      %v1435 = vsel %vm620, %v1419, 0.0
      %1436 = vadd.xlane.f32.xlu0 %v1435
      %v1437 = vpop.xlane.xlu0 %1436
      %v1438 = vsel %vm620, %v1420, 0.0
      %1439 = vadd.xlane.f32.xlu0 %v1438
      %v1440 = vpop.xlane.xlu0 %1439
      %v1441 = vsel %vm620, %v1421, 0.0
      %1442 = vadd.xlane.f32.xlu0 %v1441
      %v1443 = vpop.xlane.xlu0 %1442
      %v1444 = vsel %vm620, %v1422, 0.0
      %1445 = vadd.xlane.f32.xlu0 %v1444
      %v1446 = vpop.xlane.xlu0 %1445
      %v1447 = vsel %vm620, %v1423, 0.0
      %1448 = vadd.xlane.f32.xlu0 %v1447
      %v1449 = vpop.xlane.xlu0 %1448
      %v1450 = vsel %vm620, %v1424, 0.0
      %1451 = vadd.xlane.f32.xlu0 %v1450
      %v1452 = vpop.xlane.xlu0 %1451
      %v1453 = vsel %vm620, %v1425, 0.0
      %1454 = vadd.xlane.f32.xlu0 %v1453
      %v1455 = vpop.xlane.xlu0 %1454
      %v1456 = vsel %vm620, %v1426, 0.0
      %1457 = vadd.xlane.f32.xlu0 %v1456
      %v1458 = vpop.xlane.xlu0 %1457
      %v1459 = vsel %vm620, %v1427, 0.0
      %1460 = vadd.xlane.f32.xlu0 %v1459
      %v1461 = vpop.xlane.xlu0 %1460
      %v1462 = vsel %vm620, %v1428, 0.0
      %1463 = vadd.xlane.f32.xlu0 %v1462
      %v1464 = vpop.xlane.xlu0 %1463
      %v1465 = vsel %vm620, %v1429, 0.0
      %1466 = vadd.xlane.f32.xlu0 %v1465
      %v1467 = vpop.xlane.xlu0 %1466
      %v1468 = vsel %vm620, %v1430, 0.0
      %1469 = vadd.xlane.f32.xlu0 %v1468
      %v1470 = vpop.xlane.xlu0 %1469
      %v1471 = vsel %vm620, %v1431, 0.0
      %1472 = vadd.xlane.f32.xlu0 %v1471
      %v1473 = vpop.xlane.xlu0 %1472
      %v1474 = vsel %vm620, %v1432, 0.0
      %1475 = vadd.xlane.f32.xlu0 %v1474
      %v1476 = vpop.xlane.xlu0 %1475
      %v1477 = vsel %vm620, %v1433, 0.0
      %1478 = vadd.xlane.f32.xlu0 %v1477
      %v1479 = vpop.xlane.xlu0 %1478
      %v1480 = vsel %vm620, %v1434, 0.0
      %1481 = vadd.xlane.f32.xlu0 %v1480
      %v1482 = vpop.xlane.xlu0 %1481
      %v1483 = vmul.f32 %v1437, %v669
      %v1484 = vmul.f32 %v1440, %v669
      %v1485 = vmul.f32 %v1443, %v669
      %v1486 = vmul.f32 %v1446, %v669
      %v1487 = vmul.f32 %v1449, %v669
      %v1488 = vmul.f32 %v1452, %v669
      %v1489 = vmul.f32 %v1455, %v669
      %v1490 = vmul.f32 %v1458, %v669
      %v1491 = vmul.f32 %v1461, %v669
      %v1492 = vmul.f32 %v1464, %v669
      %v1493 = vmul.f32 %v1467, %v669
      %v1494 = vmul.f32 %v1470, %v669
      %v1495 = vmul.f32 %v1473, %v669
      %v1496 = vmul.f32 %v1476, %v669
      %v1497 = vmul.f32 %v1479, %v669
      %v1498 = vmul.f32 %v1482, %v669
      %v1499 = vsub.f32 %v1419, %v1483
      %v1500 = vsub.f32 %v1420, %v1484
      %v1501 = vsub.f32 %v1421, %v1485
      %v1502 = vsub.f32 %v1422, %v1486
      %v1503 = vsub.f32 %v1423, %v1487
      %v1504 = vsub.f32 %v1424, %v1488
      %v1505 = vsub.f32 %v1425, %v1489
      %v1506 = vsub.f32 %v1426, %v1490
      %v1507 = vsub.f32 %v1427, %v1491
      %v1508 = vsub.f32 %v1428, %v1492
      %v1509 = vsub.f32 %v1429, %v1493
      %v1510 = vsub.f32 %v1430, %v1494
      %v1511 = vsub.f32 %v1431, %v1495
      %v1512 = vsub.f32 %v1432, %v1496
      %v1513 = vsub.f32 %v1433, %v1497
      %v1514 = vsub.f32 %v1434, %v1498
      %v1515 = vmul.f32 %v1499, %v1499
      %v1516 = vmul.f32 %v1500, %v1500
      %v1517 = vmul.f32 %v1501, %v1501
      %v1518 = vmul.f32 %v1502, %v1502
      %v1519 = vmul.f32 %v1503, %v1503
      %v1520 = vmul.f32 %v1504, %v1504
      %v1521 = vmul.f32 %v1505, %v1505
      %v1522 = vmul.f32 %v1506, %v1506
      %v1523 = vmul.f32 %v1507, %v1507
      %v1524 = vmul.f32 %v1508, %v1508
      %v1525 = vmul.f32 %v1509, %v1509
      %v1526 = vmul.f32 %v1510, %v1510
      %v1527 = vmul.f32 %v1511, %v1511
      %v1528 = vmul.f32 %v1512, %v1512
      %v1529 = vmul.f32 %v1513, %v1513
      %v1530 = vmul.f32 %v1514, %v1514
      %v1531 = vsel %vm620, %v1515, 0.0
      %1532 = vadd.xlane.f32.xlu0 %v1531
      %v1533 = vpop.xlane.xlu0 %1532
      %v1534 = vsel %vm620, %v1516, 0.0
      %1535 = vadd.xlane.f32.xlu0 %v1534
      %v1536 = vpop.xlane.xlu0 %1535
      %v1537 = vsel %vm620, %v1517, 0.0
      %1538 = vadd.xlane.f32.xlu0 %v1537
      %v1539 = vpop.xlane.xlu0 %1538
      %v1540 = vsel %vm620, %v1518, 0.0
      %1541 = vadd.xlane.f32.xlu0 %v1540
      %v1542 = vpop.xlane.xlu0 %1541
      %v1543 = vsel %vm620, %v1519, 0.0
      %1544 = vadd.xlane.f32.xlu0 %v1543
      %v1545 = vpop.xlane.xlu0 %1544
      %v1546 = vsel %vm620, %v1520, 0.0
      %1547 = vadd.xlane.f32.xlu0 %v1546
      %v1548 = vpop.xlane.xlu0 %1547
      %v1549 = vsel %vm620, %v1521, 0.0
      %1550 = vadd.xlane.f32.xlu0 %v1549
      %v1551 = vpop.xlane.xlu0 %1550
      %v1552 = vsel %vm620, %v1522, 0.0
      %1553 = vadd.xlane.f32.xlu0 %v1552
      %v1554 = vpop.xlane.xlu0 %1553
      %v1555 = vsel %vm620, %v1523, 0.0
      %1556 = vadd.xlane.f32.xlu0 %v1555
      %v1557 = vpop.xlane.xlu0 %1556
      %v1558 = vsel %vm620, %v1524, 0.0
      %1559 = vadd.xlane.f32.xlu0 %v1558
      %v1560 = vpop.xlane.xlu0 %1559
      %v1561 = vsel %vm620, %v1525, 0.0
      %1562 = vadd.xlane.f32.xlu0 %v1561
      %v1563 = vpop.xlane.xlu0 %1562
      %v1564 = vsel %vm620, %v1526, 0.0
      %1565 = vadd.xlane.f32.xlu0 %v1564
      %v1566 = vpop.xlane.xlu0 %1565
      %v1567 = vsel %vm620, %v1527, 0.0
      %1568 = vadd.xlane.f32.xlu0 %v1567
      %v1569 = vpop.xlane.xlu0 %1568
      %v1570 = vsel %vm620, %v1528, 0.0
      %1571 = vadd.xlane.f32.xlu0 %v1570
      %v1572 = vpop.xlane.xlu0 %1571
      %v1573 = vsel %vm620, %v1529, 0.0
      %1574 = vadd.xlane.f32.xlu0 %v1573
      %v1575 = vpop.xlane.xlu0 %1574
      %v1576 = vsel %vm620, %v1530, 0.0
      %1577 = vadd.xlane.f32.xlu0 %v1576
      %v1578 = vpop.xlane.xlu0 %1577
      %v1579 = vmul.f32 %v1533, %v669
      %v1580 = vmul.f32 %v1536, %v669
      %v1581 = vmul.f32 %v1539, %v669
      %v1582 = vmul.f32 %v1542, %v669
      %v1583 = vmul.f32 %v1545, %v669
      %v1584 = vmul.f32 %v1548, %v669
      %v1585 = vmul.f32 %v1551, %v669
      %v1586 = vmul.f32 %v1554, %v669
      %v1587 = vmul.f32 %v1557, %v669
      %v1588 = vmul.f32 %v1560, %v669
      %v1589 = vmul.f32 %v1563, %v669
      %v1590 = vmul.f32 %v1566, %v669
      %v1591 = vmul.f32 %v1569, %v669
      %v1592 = vmul.f32 %v1572, %v669
      %v1593 = vmul.f32 %v1575, %v669
      %v1594 = vmul.f32 %v1578, %v669
      %v1595 = vadd.f32 %v1579, 1e-05
      %v1596 = vadd.f32 %v1580, 1e-05
      %v1597 = vadd.f32 %v1581, 1e-05
      %v1598 = vadd.f32 %v1582, 1e-05
      %v1599 = vadd.f32 %v1583, 1e-05
      %v1600 = vadd.f32 %v1584, 1e-05
      %v1601 = vadd.f32 %v1585, 1e-05
      %v1602 = vadd.f32 %v1586, 1e-05
      %v1603 = vadd.f32 %v1587, 1e-05
      %v1604 = vadd.f32 %v1588, 1e-05
      %v1605 = vadd.f32 %v1589, 1e-05
      %v1606 = vadd.f32 %v1590, 1e-05
      %v1607 = vadd.f32 %v1591, 1e-05
      %v1608 = vadd.f32 %v1592, 1e-05
      %v1609 = vadd.f32 %v1593, 1e-05
      %v1610 = vadd.f32 %v1594, 1e-05
      %v1611 = vrsqrt.pop %v1595
      %v1612 = vrsqrt.pop %v1596
      %v1613 = vrsqrt.pop %v1597
      %v1614 = vrsqrt.pop %v1598
      %v1615 = vrsqrt.pop %v1599
      %v1616 = vrsqrt.pop %v1600
      %v1617 = vrsqrt.pop %v1601
      %v1618 = vrsqrt.pop %v1602
      %v1619 = vrsqrt.pop %v1603
      %v1620 = vrsqrt.pop %v1604
      %v1621 = vrsqrt.pop %v1605
      %v1622 = vrsqrt.pop %v1606
      %v1623 = vrsqrt.pop %v1607
      %v1624 = vrsqrt.pop %v1608
      %v1625 = vrsqrt.pop %v1609
      %v1626 = vrsqrt.pop %v1610
      %v1627 = vmul.f32 %v1499, %v1611
      %v1628 = vmul.f32 %v1500, %v1612
      %v1629 = vmul.f32 %v1501, %v1613
      %v1630 = vmul.f32 %v1502, %v1614
      %v1631 = vmul.f32 %v1503, %v1615
      %v1632 = vmul.f32 %v1504, %v1616
      %v1633 = vmul.f32 %v1505, %v1617
      %v1634 = vmul.f32 %v1506, %v1618
      %v1635 = vmul.f32 %v1507, %v1619
      %v1636 = vmul.f32 %v1508, %v1620
      %v1637 = vmul.f32 %v1509, %v1621
      %v1638 = vmul.f32 %v1510, %v1622
      %v1639 = vmul.f32 %v1511, %v1623
      %v1640 = vmul.f32 %v1512, %v1624
      %v1641 = vmul.f32 %v1513, %v1625
      %v1642 = vmul.f32 %v1514, %v1626
      %v1643 = vld [vmem:[%s7] sm:$0xff]
      %v1644 = vld [vmem:[%s7 + $0x8] sm:$0xff]
      %v1645 = vld [vmem:[%s7 + $0x10] sm:$0xff]
      %v1646 = vld [vmem:[%s7 + $0x18] sm:$0xff]
      %v1647 = vld [vmem:[%s8] sm:$0x1]
      %v1649 = vlaneseq
      %v1650 = vshrl.u32 %v1649, 7
      %v1651 = vsub.s32 0, %v1650
      %v1652 = vrot.slane %v1647, %v1651
      %v1655 = vsel %vm620, %v1627, 0
      %v1658 = vsel %vm620, %v1628, 0
      %v1661 = vsel %vm620, %v1629, 0
      %v1664 = vsel %vm620, %v1630, 0
      %v1667 = vsel %vm620, %v1631, 0
      %v1670 = vsel %vm620, %v1632, 0
      %v1673 = vsel %vm620, %v1633, 0
      %v1676 = vsel %vm620, %v1634, 0
      %v1679 = vsel %vm620, %v1635, 0
      %v1682 = vsel %vm620, %v1636, 0
      %v1685 = vsel %vm620, %v1637, 0
      %v1688 = vsel %vm620, %v1638, 0
      %v1691 = vsel %vm620, %v1639, 0
      %v1694 = vsel %vm620, %v1640, 0
      %v1697 = vsel %vm620, %v1641, 0
      %v1700 = vsel %vm620, %v1642, 0
      %1702 = vmatprep.subr.mxu0 0.0
      %1703 = vmatpush1.msra.mxu0 %v1643
      %1704 = vmatprep.subr.mxu0 0.0
      %1705 = vmatpush1.msra.mxu0 %v1644
      %1706 = vmatprep.subr.mxu0 0.0
      %1707 = vmatpush1.msra.mxu0 %v1645
      %1708 = vmatprep.subr.mxu0 0.0
      %1709 = vmatpush1.msra.mxu0 %v1646
      %1710 = vmatprep.subr.mxu0 0.0
      %1711 = vmatpush1.msra.mxu0 0.0
      %1712 = vmatprep.subr.mxu0 0.0
      %1713 = vmatpush1.msra.mxu0 0.0
      %1714 = vmatprep.subr.mxu0 0.0
      %1715 = vmatpush1.msra.mxu0 0.0
      %1716 = vmatprep.subr.mxu0 0.0
      %1717 = vmatpush1.msra.mxu0 0.0
      %1718 = vmatprep.subr.mxu0 0.0
      %1719 = vmatpush1.msra.mxu0 0.0
      %1720 = vmatprep.subr.mxu0 0.0
      %1721 = vmatpush1.msra.mxu0 0.0
      %1722 = vmatprep.subr.mxu0 0.0
      %1723 = vmatpush1.msra.mxu0 0.0
      %1724 = vmatprep.subr.mxu0 0.0
      %1725 = vmatpush1.msra.mxu0 0.0
      %1726 = vmatprep.subr.mxu0 0.0
      %1727 = vmatpush1.msra.mxu0 0.0
      %1728 = vmatprep.subr.mxu0 0.0
      %1729 = vmatpush1.msra.mxu0 0.0
      %1730 = vmatprep.subr.mxu0 0.0
      %1731 = vmatpush1.msra.mxu0 0.0
      %1732 = vmatprep.subr.mxu0 0.0
      %1733 = vmatpush1.msra.mxu0 0.0
      %1734 = vmatprep.subr.mxu0 0.0
      %1735 = vmatpush1.msra.mxu0 0.0
      %1736 = vmatprep.subr.mxu0 0.0
      %1737 = vmatpush1.msra.mxu0 0.0
      %1738 = vmatprep.subr.mxu0 0.0
      %1739 = vmatpush1.msra.mxu0 0.0
      %1740 = vmatprep.subr.mxu0 0.0
      %1741 = vmatpush1.msra.mxu0 0.0
      %1742 = vmatprep.subr.mxu0 0.0
      %1743 = vmatpush1.msra.mxu0 0.0
      %1744 = vmatprep.subr.mxu0 0.0
      %1745 = vmatpush1.msra.mxu0 0.0
      %1746 = vmatprep.subr.mxu0 0.0
      %1747 = vmatpush1.msra.mxu0 0.0
      %1748 = vmatprep.subr.mxu0 0.0
      %1749 = vmatpush1.msra.mxu0 0.0
      %1750 = vmatprep.subr.mxu0 0.0
      %1751 = vmatpush1.msra.mxu0 0.0
      %1752 = vmatprep.subr.mxu0 0.0
      %1753 = vmatpush1.msra.mxu0 0.0
      %1754 = vmatprep.subr.mxu0 0.0
      %1755 = vmatpush1.msra.mxu0 0.0
      %1756 = vmatprep.subr.mxu0 0.0
      %1757 = vmatpush1.msra.mxu0 0.0
      %1758 = vmatprep.subr.mxu0 0.0
      %1759 = vmatpush1.msra.mxu0 0.0
      %1760 = vmatprep.subr.mxu0 0.0
      %1761 = vmatpush1.msra.mxu0 0.0
      %1762 = vmatprep.subr.mxu0 0.0
      %1763 = vmatpush1.msra.mxu0 0.0
      %1764 = vmatprep.subr.mxu0 0.0
      %1765 = vmatpush1.msra.mxu0 0.0
      %1766 = vmatprep.mubr.f32.mxu0 0.0
      %1767 = vmatmul.mubr.f32.gmra.mrb[0].mxu0 %v1655
      %v1768 = vpop.f32.mrb[0].mxu0
      %v1769 = vadd.f32 %v1652, %v1768
      %v1770 = vpop.f32.mrb[0].mxu0
      %1771 = vmatprep.mubr.f32.mxu0 0.0
      %1772 = vmatmul.mubr.f32.gmra.mrb[0].mxu0 %v1658
      %v1773 = vpop.f32.mrb[0].mxu0
      %v1774 = vadd.f32 %v1652, %v1773
      %v1775 = vpop.f32.mrb[0].mxu0
      %1776 = vmatprep.mubr.f32.mxu0 0.0
      %1777 = vmatmul.mubr.f32.gmra.mrb[0].mxu0 %v1661
      %v1778 = vpop.f32.mrb[0].mxu0
      %v1779 = vadd.f32 %v1652, %v1778
      %v1780 = vpop.f32.mrb[0].mxu0
      %1781 = vmatprep.mubr.f32.mxu0 0.0
      %1782 = vmatmul.mubr.f32.gmra.mrb[0].mxu0 %v1664
      %v1783 = vpop.f32.mrb[0].mxu0
      %v1784 = vadd.f32 %v1652, %v1783
      %v1785 = vpop.f32.mrb[0].mxu0
      %1786 = vmatprep.mubr.f32.mxu0 0.0
      %1787 = vmatmul.mubr.f32.gmra.mrb[0].mxu0 %v1667
      %v1788 = vpop.f32.mrb[0].mxu0
      %v1789 = vadd.f32 %v1652, %v1788
      %v1790 = vpop.f32.mrb[0].mxu0
      %1791 = vmatprep.mubr.f32.mxu0 0.0
      %1792 = vmatmul.mubr.f32.gmra.mrb[0].mxu0 %v1670
      %v1793 = vpop.f32.mrb[0].mxu0
      %v1794 = vadd.f32 %v1652, %v1793
      %v1795 = vpop.f32.mrb[0].mxu0
      %1796 = vmatprep.mubr.f32.mxu0 0.0
      %1797 = vmatmul.mubr.f32.gmra.mrb[0].mxu0 %v1673
      %v1798 = vpop.f32.mrb[0].mxu0
      %v1799 = vadd.f32 %v1652, %v1798
      %v1800 = vpop.f32.mrb[0].mxu0
      %1801 = vmatprep.mubr.f32.mxu0 0.0
      %1802 = vmatmul.mubr.f32.gmra.mrb[0].mxu0 %v1676
      %v1803 = vpop.f32.mrb[0].mxu0
      %v1804 = vadd.f32 %v1652, %v1803
      %v1805 = vpop.f32.mrb[0].mxu0
      %1806 = vmatprep.mubr.f32.mxu0 0.0
      %1807 = vmatmul.mubr.f32.gmra.mrb[0].mxu0 %v1679
      %v1808 = vpop.f32.mrb[0].mxu0
      %v1809 = vadd.f32 %v1652, %v1808
      %v1810 = vpop.f32.mrb[0].mxu0
      %1811 = vmatprep.mubr.f32.mxu0 0.0
      %1812 = vmatmul.mubr.f32.gmra.mrb[0].mxu0 %v1682
      %v1813 = vpop.f32.mrb[0].mxu0
      %v1814 = vadd.f32 %v1652, %v1813
      %v1815 = vpop.f32.mrb[0].mxu0
      %1816 = vmatprep.mubr.f32.mxu0 0.0
      %1817 = vmatmul.mubr.f32.gmra.mrb[0].mxu0 %v1685
      %v1818 = vpop.f32.mrb[0].mxu0
      %v1819 = vadd.f32 %v1652, %v1818
      %v1820 = vpop.f32.mrb[0].mxu0
      %1821 = vmatprep.mubr.f32.mxu0 0.0
      %1822 = vmatmul.mubr.f32.gmra.mrb[0].mxu0 %v1688
      %v1823 = vpop.f32.mrb[0].mxu0
      %v1824 = vadd.f32 %v1652, %v1823
      %v1825 = vpop.f32.mrb[0].mxu0
      %1826 = vmatprep.mubr.f32.mxu0 0.0
      %1827 = vmatmul.mubr.f32.gmra.mrb[0].mxu0 %v1691
      %v1828 = vpop.f32.mrb[0].mxu0
      %v1829 = vadd.f32 %v1652, %v1828
      %v1830 = vpop.f32.mrb[0].mxu0
      %1831 = vmatprep.mubr.f32.mxu0 0.0
      %1832 = vmatmul.mubr.f32.gmra.mrb[0].mxu0 %v1694
      %v1833 = vpop.f32.mrb[0].mxu0
      %v1834 = vadd.f32 %v1652, %v1833
      %v1835 = vpop.f32.mrb[0].mxu0
      %1836 = vmatprep.mubr.f32.mxu0 0.0
      %1837 = vmatmul.mubr.f32.gmra.mrb[0].mxu0 %v1697
      %v1838 = vpop.f32.mrb[0].mxu0
      %v1839 = vadd.f32 %v1652, %v1838
      %v1840 = vpop.f32.mrb[0].mxu0
      %1841 = vmatprep.mubr.f32.mxu0 0.0
      %1842 = vmatmul.mubr.f32.gmra.mrb[0].mxu0 %v1700
      %v1843 = vpop.f32.mrb[0].mxu0
      %v1844 = vadd.f32 %v1652, %v1843
      %v1845 = vpop.f32.mrb[0].mxu0
      %1846 = vdwg.mxu0
      %v1847 = vadd.f32 %v956, %v1769
      %v1848 = vadd.f32 %v961, %v1774
      %v1849 = vadd.f32 %v966, %v1779
      %v1850 = vadd.f32 %v971, %v1784
      %v1851 = vadd.f32 %v976, %v1789
      %v1852 = vadd.f32 %v981, %v1794
      %v1853 = vadd.f32 %v986, %v1799
      %v1854 = vadd.f32 %v991, %v1804
      %v1855 = vadd.f32 %v996, %v1809
      %v1856 = vadd.f32 %v1001, %v1814
      %v1857 = vadd.f32 %v1006, %v1819
      %v1858 = vadd.f32 %v1011, %v1824
      %v1859 = vadd.f32 %v1016, %v1829
      %v1860 = vadd.f32 %v1021, %v1834
      %v1861 = vadd.f32 %v1026, %v1839
      %v1862 = vadd.f32 %v1031, %v1844
      %vm1863 = vcmask 162816
      %1864 = vst.msk [vmem:[%s383] sm:$0xff] %vm1863, %v1847
      %1865 = vst.msk [vmem:[%s383 + $0x8] sm:$0xff] %vm1863, %v1848
      %1866 = vst.msk [vmem:[%s383 + $0x10] sm:$0xff] %vm1863, %v1849
      %1867 = vst.msk [vmem:[%s383 + $0x18] sm:$0xff] %vm1863, %v1850
      %1868 = vst.msk [vmem:[%s383 + $0x20] sm:$0xff] %vm1863, %v1851
      %1869 = vst.msk [vmem:[%s383 + $0x28] sm:$0xff] %vm1863, %v1852
      %1870 = vst.msk [vmem:[%s383 + $0x30] sm:$0xff] %vm1863, %v1853
      %1871 = vst.msk [vmem:[%s383 + $0x38] sm:$0xff] %vm1863, %v1854
      %1872 = vst.msk [vmem:[%s383 + $0x40] sm:$0xff] %vm1863, %v1855
      %1873 = vst.msk [vmem:[%s383 + $0x48] sm:$0xff] %vm1863, %v1856
      %1874 = vst.msk [vmem:[%s383 + $0x50] sm:$0xff] %vm1863, %v1857
      %1875 = vst.msk [vmem:[%s383 + $0x58] sm:$0xff] %vm1863, %v1858
      %1876 = vst.msk [vmem:[%s383 + $0x60] sm:$0xff] %vm1863, %v1859
      %1877 = vst.msk [vmem:[%s383 + $0x68] sm:$0xff] %vm1863, %v1860
      %1878 = vst.msk [vmem:[%s383 + $0x70] sm:$0xff] %vm1863, %v1861
      %1879 = vst.msk [vmem:[%s383 + $0x78] sm:$0xff] %vm1863, %v1862
      %s1880 = smul.u32 16, %s21
      %p1881 = scmp.lt.s32.totalorder %s1880, 31
      %s1882 = scalar_select %p1881, %s1880, 31
      %s1883 = smul.addr %s1882, 8
      %s1884 = scalar_lea.vmem %s10, %s1883
      // Predicated region
      $region61: #{vae_forward.1} parent=59 // pred_check
        %p1885 = pneg %p259
      $region62: #{vae_forward.1} parent=59 // pred_check_branch
        %1887 = sbr.rel (%p1885) target = $region64
      $region63: #{vae_forward.1} parent=59 // pred_region
        %s1888 = smul.u32 16, %s21
      $region64: #{vae_forward.1} parent=59 // pred_fallthru
        _
    $region60: #{vae_forward.1} parent=5 // pred_fallthru
      _
    %p1889 = scmp.le.s32.totalorder 2, %s16
    // Predicated region
    $region65: #{vae_forward.1} parent=5 // pred_check
      %p1890 = pneg %p1889
    $region66: #{vae_forward.1} parent=5 // pred_check_branch
      %1892 = sbr.rel (%p1890) target = $region68
    $region67: #{vae_forward.1} parent=5 // pred_region
      %s1893 = ssub.s32 %s16, 2
      // Predicated region
      $region69: #{vae_forward.1} parent=67 // pred_check
        %p1894 = pneg %p265
      $region70: #{vae_forward.1} parent=67 // pred_check_branch
        %1896 = sbr.rel (%p1894) target = $region72
      $region71: #{vae_forward.1} parent=67 // pred_region
        %s1897 = smul.u32 16, %s22
        %p1898 = scmp.lt.s32.totalorder %s1897, 31
        %s1899 = scalar_select %p1898, %s1897, 31
        %s1900 = smul.addr %s1899, 8
        %s1901 = scalar_lea.vmem %s10, %s1900
      $region72: #{vae_forward.1} parent=67 // pred_fallthru
        _
    $region68: #{vae_forward.1} parent=5 // pred_fallthru
      _
  $region6: #{vae_forward.1} parent=0 // loop_footer
    %s20 = sadd.s32 1, %s16
  $region7: #{vae_forward.1} parent=0 // loop_footer_branch
    %15 = sbr.rel target = $region3
  $region8: #{vae_forward.1} parent=0 // loop_exit
    _

</llo_original>
